<compile_context>
chip_gen: v7x
topology: tpu7x:2x2x1
jax: 0.10.0
libtpu: 0.0.40
codegen_flags: <defaults>
</compile_context>

<pallas_src>
import jax
import jax.numpy as jnp
from jax import lax
from jax.experimental import pallas as pl
from jax.experimental.pallas import tpu as pltpu


def _round_up(x, m):
    return (x + m - 1) // m * m


def _pick_batch_block(batch, target=8):
    """Largest divisor of `batch` <= target that keeps >= 2 grid steps, so the
    batch-parallel grid can still be split across v7x's two TensorCores."""
    bt = min(batch, target)
    if batch >= 2:
        bt = min(bt, batch // 2)
    bt = max(bt, 1)
    while batch % bt:
        bt -= 1
    return bt


# --------------------------------------------------------------------------
# Fused encoder kernel
# --------------------------------------------------------------------------
def _make_encoder_kernel(bt, oh3, ow3):
    """Builds the fused kernel for a (bt, ...) batch block.

    Row layout produced by the host (per image, see _build_conv1_patches):
      conv1 patch rows = 4 pool-position blocks (a, b), each of q1 rows.
      Within a block, the pooled pixel (u, v) sits at index
        ((u%2)*2 + v%2) * m2  +  (((u//2)%2)*2 + (v//2)%2) * m3  +  (u//4)*ow3 + v//4
      i.e. 4 conv2-phase blocks of m2 rows, each made of 4 conv3-phase
      sub-blocks of m3 rows in (s, t) raster.  With this ordering the 2x2 pool
      is an elementwise max of 4 contiguous blocks and the stride-2 3x3
      patch extraction for conv2 / conv3 only needs contiguous sub-block
      slices, row-block shifts and a constant column mask.
    """
    m3 = oh3 * ow3            # conv3 output pixels per image
    m2 = 4 * m3               # conv2 output pixels per image
    q1 = 16 * m3              # pooled pixels per image
    m3p = _round_up(m3, 8)    # pad rows so the conv3 matmul reshape is tile aligned
    bf = jnp.bfloat16

    def kernel(p1_ref, w1_ref, b1_ref, w2_ref, b2_ref, w3_ref, b3_ref, o_ref):
        # ---------------- conv1 + ReLU: one batched (Bt*4*q1, 80)x(80,16) ----
        p1 = p1_ref[...].reshape(bt * 4 * q1, p1_ref.shape[-1])
        y1 = jnp.dot(p1, w1_ref[...], preferred_element_type=jnp.float32)
        y1 = jnp.maximum(y1 + b1_ref[...], 0.0)            # f32 epilogue
        y1 = y1.reshape(bt, 4, q1, 16)

        # ---------------- 2x2/2 max-pool: max of the 4 pool-position blocks --
        pooled = jnp.maximum(jnp.maximum(y1[:, 0], y1[:, 1]),
                             jnp.maximum(y1[:, 2], y1[:, 3]))
        pooled = pooled.astype(bf)                          # (bt, q1, 16)

        # mask zeroing rows with t == 0 inside an (s, t) raster block of m3 rows
        tmask = (lax.broadcasted_iota(jnp.int32, (1, m3, 1), 1) % ow3 != 0).astype(bf)

        def shift_s(x):   # (bt, m3, C): out[s, t] = in[s-1, t], zeros at s == 0
            z = jnp.zeros((bt, ow3, x.shape[-1]), x.dtype)
            return jnp.concatenate([z, x[:, :m3 - ow3, :]], axis=1)

        def shift_t(x):   # (bt, m3, C): out[s, t] = in[s, t-1], zeros at t == 0
            z = jnp.zeros((bt, 1, x.shape[-1]), x.dtype)
            return jnp.concatenate([z, x[:, :m3 - 1, :]], axis=1) * tmask

        def sub(q, g, d):  # conv3-phase (gamma, delta) sub-block of a K2-ordered block
            i = (g * 2 + d) * m3
            return q[:, i:i + m3, :]

        def shift_block_r(q):   # K2-ordered (bt, m2, C): out[r, c] = in[r-1, c]
            return jnp.concatenate(
                [shift_s(sub(q, 1, 0)), shift_s(sub(q, 1, 1)),
                 sub(q, 0, 0), sub(q, 0, 1)], axis=1)

        def shift_block_c(q):   # K2-ordered (bt, m2, C): out[r, c] = in[r, c-1]
            return jnp.concatenate(
                [shift_t(sub(q, 0, 1)), sub(q, 0, 0),
                 shift_t(sub(q, 1, 1)), sub(q, 1, 0)], axis=1)

        # ---------------- conv2 + ReLU: patches built in VMEM, one matmul ----
        def phase2(a, b):       # conv2-phase (u%2, v%2) block of the pooled rows
            i = (a * 2 + b) * m2
            return pooled[:, i:i + m2, :]

        taps2 = []
        for di in range(3):
            a = 0 if di == 1 else 1
            for dj in range(3):
                b = 0 if dj == 1 else 1
                tap = phase2(a, b)
                if dj == 0:
                    tap = shift_block_c(tap)
                if di == 0:
                    tap = shift_block_r(tap)
                taps2.append(tap)
        patches2 = jnp.concatenate(taps2, axis=-1)          # (bt, m2, 144)
        y2 = jnp.dot(patches2.reshape(bt * m2, 9 * 16), w2_ref[...],
                     preferred_element_type=jnp.float32)
        y2 = jnp.maximum(y2 + b2_ref[...], 0.0).astype(bf)
        y2 = y2.reshape(bt, m2, 32)
        # y2 rows per image are in K2 order: 4 blocks by conv3 phase (r%2, c%2),
        # each in (s, t) raster -> conv3 patches are again block slices + shifts.

        # ---------------- conv3 + ReLU: one (bt*m3p, 288)x(288, 64) matmul ----
        taps3 = []
        for di in range(3):
            g = 0 if di == 1 else 1
            for dj in range(3):
                d = 0 if dj == 1 else 1
                tap = sub(y2, g, d)
                if dj == 0:
                    tap = shift_t(tap)
                if di == 0:
                    tap = shift_s(tap)
                taps3.append(tap)
        patches3 = jnp.concatenate(taps3, axis=-1)          # (bt, m3, 288)
        if m3p != m3:
            zpad = jnp.zeros((bt, m3p - m3, patches3.shape[-1]), bf)
            patches3 = jnp.concatenate([patches3, zpad], axis=1)
        y3 = jnp.dot(patches3.reshape(bt * m3p, 9 * 32), w3_ref[...],
                     preferred_element_type=jnp.float32)
        y3 = jnp.maximum(y3 + b3_ref[...], 0.0)             # f32 epilogue
        y3 = y3.reshape(bt, m3p, 64)
        o_ref[...] = y3[:, :m3, :]

    return kernel


# --------------------------------------------------------------------------
# Host-side (XLA) glue
# --------------------------------------------------------------------------
def _build_conv1_patches(x_nhwc, oh3, ow3):
    """NHWC input -> (B, 4, 16*oh3*ow3, 80) bf16 conv1 im2col patches.

    conv1 output pixel (o, p) decomposes as o = 8s + 4*gamma + 2*alpha + a,
    p = 8t + 4*delta + 2*beta + b, where (a, b) is the 2x2 pool position,
    (alpha, beta) the conv2 stride-2 phase and (gamma, delta) the conv3
    stride-2 phase.  Rows are emitted in (a, b | alpha, beta, gamma, delta,
    s, t) order so all downstream steps are contiguous row-block ops.
    """
    B, H, W, _ = x_nhwc.shape
    oh1, ow1 = H // 2, W // 2
    xp = jnp.pad(x_nhwc, ((0, 0), (2, 2), (2, 2), (0, 0)))
    cols = [xp[:, di:di + 2 * oh1 - 1:2, dj:dj + 2 * ow1 - 1:2, :]
            for di in range(5) for dj in range(5)]
    r = jnp.concatenate(cols, axis=-1)                      # (B, OH1, OW1, 75)
    r = r.reshape(B, oh3, 2, 2, 2, ow3, 2, 2, 2, 75)        # (B, s,g,al,a, t,d,be,b, K)
    r = r.transpose(0, 4, 8, 3, 7, 2, 6, 1, 5, 9)           # (B, a,b, al,be,g,d, s,t, K)
    r = r.reshape(B, 4, 16 * oh3 * ow3, 75)
    r = jnp.pad(r, ((0, 0), (0, 0), (0, 0), (0, 5)))        # K: 75 -> 80 (aligned)
    return r.astype(jnp.bfloat16)


def _conv_weight_matrix(w):
    """PyTorch OIHW -> (kh*kw*Cin, Cout), matching the (di, dj, c) patch order."""
    cout, cin, kh, kw = w.shape
    return jnp.transpose(w, (2, 3, 1, 0)).reshape(kh * kw * cin, cout)


# --------------------------------------------------------------------------
# Encoder
# --------------------------------------------------------------------------
def init_encoder_params(key):
    """Deterministic (uniform, fan_in-scaled) init mimicking nn.Conv2d shapes."""
    def conv_init(k, cout, cin, kh, kw):
        kw_, kb_ = jax.random.split(k)
        fan_in = cin * kh * kw
        bound = 1.0 / jnp.sqrt(fan_in)
        w = jax.random.uniform(kw_, (cout, cin, kh, kw), jnp.float32, -bound, bound)
        b = jax.random.uniform(kb_, (cout,), jnp.float32, -bound, bound)
        return w, b

    k1, k2, k3 = jax.random.split(key, 3)
    return {
        "conv1": conv_init(k1, 16, 3, 5, 5),
        "conv2": conv_init(k2, 32, 16, 3, 3),
        "conv3": conv_init(k3, 64, 32, 3, 3),
    }


def encoder_forward(params, x, *, block_b=None):
    """x: (B, 3, H, W) NCHW (PyTorch interface). Returns (B, 64*(H//16)*(W//16))."""
    w1, b1 = params["conv1"]
    w2, b2 = params["conv2"]
    w3, b3 = params["conv3"]
    B, C, H, W = x.shape
    # TODO(synk): general H/W support; the fused row-block construction assumes
    # spatial dims that are multiples of 16 (true for the module's 128x144 input).
    assert C == 3 and H % 16 == 0 and W % 16 == 0, (C, H, W)
    oh3, ow3 = H // 16, W // 16
    m3, m2, q1 = oh3 * ow3, 4 * oh3 * ow3, 16 * oh3 * ow3
    assert m2 % 8 == 0, "need oh3*ow3 even so in-kernel reshapes stay tile aligned"
    m3p = _round_up(m3, 8)

    bt = block_b if block_b is not None else _pick_batch_block(B)
    assert B % bt == 0, (B, bt)

    x_nhwc = jnp.transpose(x, (0, 2, 3, 1))
    p1 = _build_conv1_patches(x_nhwc, oh3, ow3)             # (B, 4, q1, 80) bf16
    w1m = jnp.pad(_conv_weight_matrix(w1), ((0, 5), (0, 0))).astype(jnp.bfloat16)
    w2m = _conv_weight_matrix(w2).astype(jnp.bfloat16)      # (144, 32)
    w3m = _conv_weight_matrix(w3).astype(jnp.bfloat16)      # (288, 64)
    b1m = b1.reshape(1, -1).astype(jnp.float32)
    b2m = b2.reshape(1, -1).astype(jnp.float32)
    b3m = b3.reshape(1, -1).astype(jnp.float32)

    flops = 2 * B * (4 * q1 * 80 * 16 + m2 * 144 * 32 + m3p * 288 * 64)
    bytes_accessed = (p1.size * 2
                      + (w1m.size + w2m.size + w3m.size) * 2
                      + (b1m.size + b2m.size + b3m.size) * 4
                      + B * m3 * 64 * 4)

    kernel = _make_encoder_kernel(bt, oh3, ow3)
    y = pl.pallas_call(
        kernel,
        out_shape=jax.ShapeDtypeStruct((B, m3, 64), jnp.float32),
        grid=(B // bt,),
        in_specs=[
            pl.BlockSpec((bt, 4, q1, 80), lambda i: (i, 0, 0, 0)),
            pl.BlockSpec((80, 16), lambda i: (0, 0)),
            pl.BlockSpec((1, 16), lambda i: (0, 0)),
            pl.BlockSpec((144, 32), lambda i: (0, 0)),
            pl.BlockSpec((1, 32), lambda i: (0, 0)),
            pl.BlockSpec((288, 64), lambda i: (0, 0)),
            pl.BlockSpec((1, 64), lambda i: (0, 0)),
        ],
        out_specs=pl.BlockSpec((bt, m3, 64), lambda i: (i, 0, 0)),
        compiler_params=pltpu.CompilerParams(
            dimension_semantics=("parallel",),
            vmem_limit_bytes=64 * 1024 * 1024),
        cost_estimate=pl.CostEstimate(flops=flops, transcendentals=0,
                                      bytes_accessed=bytes_accessed),
    )(p1, w1m, b1m, w2m, b2m, w3m, b3m)

    # TODO(synk): emit a lane-dense flattened row directly from the kernel
    # (needs an in-kernel (m3,64)->(64,m3) transpose); for now the tiny NCHW
    # flatten permutation is done on the host.
    return jnp.transpose(y, (0, 2, 1)).reshape(B, 64 * m3)


# --------------------------------------------------------------------------
# References for correctness checks
# --------------------------------------------------------------------------
def encoder_reference_f32(params, x):
    """Pure-f32 lax.conv reference (PyTorch semantics)."""
    def conv(x, w, b, stride, pad):
        y = lax.conv_general_dilated(
            x, w, window_strides=(stride, stride),
            padding=[(pad, pad), (pad, pad)],
            dimension_numbers=("NCHW", "OIHW", "NCHW"))
        return jax.nn.relu(y + b[None, :, None, None])

    w1, b1 = params["conv1"]
    w2, b2 = params["conv2"]
    w3, b3 = params["conv3"]
    x = conv(x, w1, b1, 2, 2)
    x = lax.reduce_window(x, -jnp.inf, lax.max, (1, 1, 2, 2), (1, 1, 2, 2), "VALID")
    x = conv(x, w2, b2, 2, 1)
    x = conv(x, w3, b3, 2, 1)
    return x.reshape(x.shape[0], -1)


def encoder_reference_bf16(params, x):
    """Reference with the same bf16 matmul inputs / f32 accumulation+epilogue
    and the same inter-layer bf16 rounding points as the Pallas pipeline."""
    bf = jnp.bfloat16

    def conv(x, w, b, stride, pad):
        y = lax.conv_general_dilated(
            x.astype(bf), w.astype(bf), window_strides=(stride, stride),
            padding=[(pad, pad), (pad, pad)],
            dimension_numbers=("NCHW", "OIHW", "NCHW"),
            preferred_element_type=jnp.float32)
        return jax.nn.relu(y + b[None, :, None, None])

    w1, b1 = params["conv1"]
    w2, b2 = params["conv2"]
    w3, b3 = params["conv3"]
    x = conv(x, w1, b1, 2, 2)
    x = lax.reduce_window(x, -jnp.inf, lax.max,
                          (1, 1, 2, 2), (1, 1, 2, 2), "VALID").astype(bf)
    x = conv(x, w2, b2, 2, 1).astype(bf)
    x = conv(x, w3, b3, 2, 1)
    return x.reshape(x.shape[0], -1)


if __name__ == "__main__":
    # Small shapes consistent with the module's NCHW (3, H, W) input.
    B, C, H, W = 4, 3, 32, 48
    key = jax.random.PRNGKey(0)
    kx, kp = jax.random.split(key)
    x = jax.random.normal(kx, (B, C, H, W), jnp.float32)
    params = init_encoder_params(kp)

    fwd = jax.jit(encoder_forward)
    out = jax.block_until_ready(fwd(params, x))

    ref16 = jax.block_until_ready(encoder_reference_bf16(params, x))
    ref32 = jax.block_until_ready(encoder_reference_f32(params, x))

    assert out.shape == (B, 64 * (H // 16) * (W // 16)), out.shape
    # tight check vs a reference using the same bf16 matmul inputs
    assert jnp.allclose(out, ref16, atol=2e-3, rtol=2e-3), \
        float(jnp.max(jnp.abs(out - ref16)))
    # loose check vs the full-precision PyTorch-semantics reference
    assert jnp.allclose(out, ref32, atol=5e-2, rtol=5e-2), \
        float(jnp.max(jnp.abs(out - ref32)))
    print("KERNEL_OK")
</pallas_src>

<mosaic_0001>
module attributes {stable_mosaic.version = 11 : i64} {
  func.func @kernel(%arg0: i32, %arg1: memref<2x4x96x80xbf16, #tpu.memory_space<vmem>>, %arg2: memref<80x16xbf16, #tpu.memory_space<vmem>>, %arg3: memref<1x16xf32, #tpu.memory_space<vmem>>, %arg4: memref<144x32xbf16, #tpu.memory_space<vmem>>, %arg5: memref<1x32xf32, #tpu.memory_space<vmem>>, %arg6: memref<288x64xbf16, #tpu.memory_space<vmem>>, %arg7: memref<1x64xf32, #tpu.memory_space<vmem>>, %arg8: memref<2x6x64xf32, #tpu.memory_space<vmem>>) attributes {dimension_semantics = [#tpu.dimension_semantics<parallel>], iteration_bounds = array<i64: 2>, scalar_prefetch = 0 : i64, scratch_operands = 0 : i64, tpu.core_type = #tpu.core_type<tc>, window_params = [{transform_indices = @transform_0, window_bounds = array<i64: 2, 4, 96, 80>}, {pipeline_mode = #tpu.pipeline_mode<synchronous>, transform_indices = @transform_1, window_bounds = array<i64: 80, 16>}, {pipeline_mode = #tpu.pipeline_mode<synchronous>, transform_indices = @transform_2, window_bounds = array<i64: 1, 16>}, {pipeline_mode = #tpu.pipeline_mode<synchronous>, transform_indices = @transform_3, window_bounds = array<i64: 144, 32>}, {pipeline_mode = #tpu.pipeline_mode<synchronous>, transform_indices = @transform_4, window_bounds = array<i64: 1, 32>}, {pipeline_mode = #tpu.pipeline_mode<synchronous>, transform_indices = @transform_5, window_bounds = array<i64: 288, 64>}, {pipeline_mode = #tpu.pipeline_mode<synchronous>, transform_indices = @transform_6, window_bounds = array<i64: 1, 64>}, {transform_indices = @transform_7, window_bounds = array<i64: 2, 6, 64>}]} {
    %c0 = arith.constant 0 : index
    %c0_0 = arith.constant 0 : index
    %c0_1 = arith.constant 0 : index
    %c0_2 = arith.constant 0 : index
    %0 = vector.load %arg1[%c0, %c0_0, %c0_1, %c0_2] : memref<2x4x96x80xbf16, #tpu.memory_space<vmem>>, vector<2x4x96x80xbf16>
    %1 = vector.shape_cast %0 : vector<2x4x96x80xbf16> to vector<768x80xbf16>
    %c0_3 = arith.constant 0 : index
    %c0_4 = arith.constant 0 : index
    %2 = vector.load %arg2[%c0_3, %c0_4] : memref<80x16xbf16, #tpu.memory_space<vmem>>, vector<80x16xbf16>
    %cst = arith.constant dense<0.000000e+00> : vector<768x16xf32>
    %3 = tpu.matmul %1, %2, %cst {dimension_numbers = #tpu.dot_dimension_numbers<[1], [0], [0], [1], [0, 0, 1, 1], [], []>} : vector<768x80xbf16>, vector<80x16xbf16>, vector<768x16xf32> -> vector<768x16xf32>
    %c0_5 = arith.constant 0 : index
    %c0_6 = arith.constant 0 : index
    %4 = vector.load %arg3[%c0_5, %c0_6] : memref<1x16xf32, #tpu.memory_space<vmem>>, vector<1x16xf32>
    %5 = vector.broadcast %4 : vector<1x16xf32> to vector<768x16xf32>
    %6 = arith.addf %3, %5 : vector<768x16xf32>
    %cst_7 = arith.constant 0.000000e+00 : f32
    %7 = vector.broadcast %cst_7 : f32 to vector<768x16xf32>
    %8 = arith.maximumf %6, %7 : vector<768x16xf32>
    %9 = vector.shape_cast %8 : vector<768x16xf32> to vector<2x4x96x16xf32>
    %10 = vector.extract_strided_slice %9 {offsets = [0, 0, 0, 0], sizes = [2, 1, 96, 16], strides = [1, 1, 1, 1]} : vector<2x4x96x16xf32> to vector<2x1x96x16xf32>
    %11 = vector.shape_cast %10 : vector<2x1x96x16xf32> to vector<2x96x16xf32>
    %12 = vector.extract_strided_slice %9 {offsets = [0, 1, 0, 0], sizes = [2, 1, 96, 16], strides = [1, 1, 1, 1]} : vector<2x4x96x16xf32> to vector<2x1x96x16xf32>
    %13 = vector.shape_cast %12 : vector<2x1x96x16xf32> to vector<2x96x16xf32>
    %14 = arith.maximumf %11, %13 : vector<2x96x16xf32>
    %15 = vector.extract_strided_slice %9 {offsets = [0, 2, 0, 0], sizes = [2, 1, 96, 16], strides = [1, 1, 1, 1]} : vector<2x4x96x16xf32> to vector<2x1x96x16xf32>
    %16 = vector.shape_cast %15 : vector<2x1x96x16xf32> to vector<2x96x16xf32>
    %17 = vector.extract_strided_slice %9 {offsets = [0, 3, 0, 0], sizes = [2, 1, 96, 16], strides = [1, 1, 1, 1]} : vector<2x4x96x16xf32> to vector<2x1x96x16xf32>
    %18 = vector.shape_cast %17 : vector<2x1x96x16xf32> to vector<2x96x16xf32>
    %19 = arith.maximumf %16, %18 : vector<2x96x16xf32>
    %20 = arith.maximumf %14, %19 : vector<2x96x16xf32>
    %21 = arith.truncf %20 : vector<2x96x16xf32> to vector<2x96x16xbf16>
    %22 = tpu.iota {dimensions = array<i32: 1>} : vector<1x6x1xi32>
    %c3_i32 = arith.constant 3 : i32
    %c0_i32 = arith.constant 0 : i32
    %23 = arith.cmpi eq, %c3_i32, %c0_i32 : i32
    %c1_i32 = arith.constant 1 : i32
    %24 = arith.select %23, %c1_i32, %c3_i32 : i32
    %25 = vector.broadcast %24 : i32 to vector<1x6x1xi32>
    %26 = arith.remsi %22, %25 : vector<1x6x1xi32>
    %c0_i32_8 = arith.constant 0 : i32
    %27 = vector.broadcast %c0_i32_8 : i32 to vector<1x6x1xi32>
    %28 = arith.cmpi ne, %26, %27 : vector<1x6x1xi32>
    %c0_i32_9 = arith.constant 0 : i32
    %29 = vector.broadcast %c0_i32_9 : i32 to vector<1x6x1xi32>
    %30 = arith.cmpi slt, %26, %29 : vector<1x6x1xi32>
    %c0_i32_10 = arith.constant 0 : i32
    %31 = arith.cmpi slt, %24, %c0_i32_10 : i32
    %32 = vector.broadcast %31 : i1 to vector<1x6x1xi1>
    %33 = vector.broadcast %32 : vector<1x6x1xi1> to vector<1x6x1xi1>
    %34 = arith.xori %30, %33 : vector<1x6x1xi1>
    %35 = arith.andi %34, %28 : vector<1x6x1xi1>
    %36 = vector.broadcast %24 : i32 to vector<1x6x1xi32>
    %37 = arith.addi %26, %36 : vector<1x6x1xi32>
    %38 = arith.select %35, %37, %26 : vector<1x6x1xi1>, vector<1x6x1xi32>
    %c0_i32_11 = arith.constant 0 : i32
    %39 = vector.broadcast %c0_i32_11 : i32 to vector<1x6x1xi32>
    %40 = arith.cmpi ne, %38, %39 : vector<1x6x1xi32>
    %41 = arith.extui %40 : vector<1x6x1xi1> to vector<1x6x1xi32>
    %42 = arith.sitofp %41 : vector<1x6x1xi32> to vector<1x6x1xf32>
    %43 = arith.truncf %42 : vector<1x6x1xf32> to vector<1x6x1xbf16>
    %44 = vector.extract_strided_slice %21 {offsets = [0, 72, 0], sizes = [2, 24, 16], strides = [1, 1, 1]} : vector<2x96x16xbf16> to vector<2x24x16xbf16>
    %45 = vector.extract_strided_slice %44 {offsets = [0, 6, 0], sizes = [2, 6, 16], strides = [1, 1, 1]} : vector<2x24x16xbf16> to vector<2x6x16xbf16>
    %cst_12 = arith.constant 0.000000e+00 : bf16
    %46 = vector.broadcast %cst_12 : bf16 to vector<2x1x16xbf16>
    %47 = vector.extract_strided_slice %45 {offsets = [0, 0, 0], sizes = [2, 5, 16], strides = [1, 1, 1]} : vector<2x6x16xbf16> to vector<2x5x16xbf16>
    %48 = tpu.concatenate %46, %47 in 1 : vector<2x1x16xbf16>, vector<2x5x16xbf16> -> vector<2x6x16xbf16>
    %49 = vector.broadcast %43 : vector<1x6x1xbf16> to vector<2x6x16xbf16>
    %50 = arith.mulf %48, %49 : vector<2x6x16xbf16>
    %51 = vector.extract_strided_slice %44 {offsets = [0, 0, 0], sizes = [2, 6, 16], strides = [1, 1, 1]} : vector<2x24x16xbf16> to vector<2x6x16xbf16>
    %52 = vector.extract_strided_slice %44 {offsets = [0, 18, 0], sizes = [2, 6, 16], strides = [1, 1, 1]} : vector<2x24x16xbf16> to vector<2x6x16xbf16>
    %cst_13 = arith.constant 0.000000e+00 : bf16
    %53 = vector.broadcast %cst_13 : bf16 to vector<2x1x16xbf16>
    %54 = vector.extract_strided_slice %52 {offsets = [0, 0, 0], sizes = [2, 5, 16], strides = [1, 1, 1]} : vector<2x6x16xbf16> to vector<2x5x16xbf16>
    %55 = tpu.concatenate %53, %54 in 1 : vector<2x1x16xbf16>, vector<2x5x16xbf16> -> vector<2x6x16xbf16>
    %56 = vector.broadcast %43 : vector<1x6x1xbf16> to vector<2x6x16xbf16>
    %57 = arith.mulf %55, %56 : vector<2x6x16xbf16>
    %58 = vector.extract_strided_slice %44 {offsets = [0, 12, 0], sizes = [2, 6, 16], strides = [1, 1, 1]} : vector<2x24x16xbf16> to vector<2x6x16xbf16>
    %59 = tpu.concatenate %50, %51, %57, %58 in 1 : vector<2x6x16xbf16>, vector<2x6x16xbf16>, vector<2x6x16xbf16>, vector<2x6x16xbf16> -> vector<2x24x16xbf16>
    %60 = vector.extract_strided_slice %59 {offsets = [0, 12, 0], sizes = [2, 6, 16], strides = [1, 1, 1]} : vector<2x24x16xbf16> to vector<2x6x16xbf16>
    %cst_14 = arith.constant 0.000000e+00 : bf16
    %61 = vector.broadcast %cst_14 : bf16 to vector<2x3x16xbf16>
    %62 = vector.extract_strided_slice %60 {offsets = [0, 0, 0], sizes = [2, 3, 16], strides = [1, 1, 1]} : vector<2x6x16xbf16> to vector<2x3x16xbf16>
    %63 = tpu.concatenate %61, %62 in 1 : vector<2x3x16xbf16>, vector<2x3x16xbf16> -> vector<2x6x16xbf16>
    %64 = vector.extract_strided_slice %59 {offsets = [0, 18, 0], sizes = [2, 6, 16], strides = [1, 1, 1]} : vector<2x24x16xbf16> to vector<2x6x16xbf16>
    %cst_15 = arith.constant 0.000000e+00 : bf16
    %65 = vector.broadcast %cst_15 : bf16 to vector<2x3x16xbf16>
    %66 = vector.extract_strided_slice %64 {offsets = [0, 0, 0], sizes = [2, 3, 16], strides = [1, 1, 1]} : vector<2x6x16xbf16> to vector<2x3x16xbf16>
    %67 = tpu.concatenate %65, %66 in 1 : vector<2x3x16xbf16>, vector<2x3x16xbf16> -> vector<2x6x16xbf16>
    %68 = vector.extract_strided_slice %59 {offsets = [0, 0, 0], sizes = [2, 6, 16], strides = [1, 1, 1]} : vector<2x24x16xbf16> to vector<2x6x16xbf16>
    %69 = vector.extract_strided_slice %59 {offsets = [0, 6, 0], sizes = [2, 6, 16], strides = [1, 1, 1]} : vector<2x24x16xbf16> to vector<2x6x16xbf16>
    %70 = tpu.concatenate %63, %67, %68, %69 in 1 : vector<2x6x16xbf16>, vector<2x6x16xbf16>, vector<2x6x16xbf16>, vector<2x6x16xbf16> -> vector<2x24x16xbf16>
    %71 = vector.extract_strided_slice %21 {offsets = [0, 48, 0], sizes = [2, 24, 16], strides = [1, 1, 1]} : vector<2x96x16xbf16> to vector<2x24x16xbf16>
    %72 = vector.extract_strided_slice %71 {offsets = [0, 12, 0], sizes = [2, 6, 16], strides = [1, 1, 1]} : vector<2x24x16xbf16> to vector<2x6x16xbf16>
    %cst_16 = arith.constant 0.000000e+00 : bf16
    %73 = vector.broadcast %cst_16 : bf16 to vector<2x3x16xbf16>
    %74 = vector.extract_strided_slice %72 {offsets = [0, 0, 0], sizes = [2, 3, 16], strides = [1, 1, 1]} : vector<2x6x16xbf16> to vector<2x3x16xbf16>
    %75 = tpu.concatenate %73, %74 in 1 : vector<2x3x16xbf16>, vector<2x3x16xbf16> -> vector<2x6x16xbf16>
    %76 = vector.extract_strided_slice %71 {offsets = [0, 18, 0], sizes = [2, 6, 16], strides = [1, 1, 1]} : vector<2x24x16xbf16> to vector<2x6x16xbf16>
    %cst_17 = arith.constant 0.000000e+00 : bf16
    %77 = vector.broadcast %cst_17 : bf16 to vector<2x3x16xbf16>
    %78 = vector.extract_strided_slice %76 {offsets = [0, 0, 0], sizes = [2, 3, 16], strides = [1, 1, 1]} : vector<2x6x16xbf16> to vector<2x3x16xbf16>
    %79 = tpu.concatenate %77, %78 in 1 : vector<2x3x16xbf16>, vector<2x3x16xbf16> -> vector<2x6x16xbf16>
    %80 = vector.extract_strided_slice %71 {offsets = [0, 0, 0], sizes = [2, 6, 16], strides = [1, 1, 1]} : vector<2x24x16xbf16> to vector<2x6x16xbf16>
    %81 = vector.extract_strided_slice %71 {offsets = [0, 6, 0], sizes = [2, 6, 16], strides = [1, 1, 1]} : vector<2x24x16xbf16> to vector<2x6x16xbf16>
    %82 = tpu.concatenate %75, %79, %80, %81 in 1 : vector<2x6x16xbf16>, vector<2x6x16xbf16>, vector<2x6x16xbf16>, vector<2x6x16xbf16> -> vector<2x24x16xbf16>
    %83 = vector.extract_strided_slice %21 {offsets = [0, 72, 0], sizes = [2, 24, 16], strides = [1, 1, 1]} : vector<2x96x16xbf16> to vector<2x24x16xbf16>
    %84 = vector.extract_strided_slice %83 {offsets = [0, 12, 0], sizes = [2, 6, 16], strides = [1, 1, 1]} : vector<2x24x16xbf16> to vector<2x6x16xbf16>
    %cst_18 = arith.constant 0.000000e+00 : bf16
    %85 = vector.broadcast %cst_18 : bf16 to vector<2x3x16xbf16>
    %86 = vector.extract_strided_slice %84 {offsets = [0, 0, 0], sizes = [2, 3, 16], strides = [1, 1, 1]} : vector<2x6x16xbf16> to vector<2x3x16xbf16>
    %87 = tpu.concatenate %85, %86 in 1 : vector<2x3x16xbf16>, vector<2x3x16xbf16> -> vector<2x6x16xbf16>
    %88 = vector.extract_strided_slice %83 {offsets = [0, 18, 0], sizes = [2, 6, 16], strides = [1, 1, 1]} : vector<2x24x16xbf16> to vector<2x6x16xbf16>
    %cst_19 = arith.constant 0.000000e+00 : bf16
    %89 = vector.broadcast %cst_19 : bf16 to vector<2x3x16xbf16>
    %90 = vector.extract_strided_slice %88 {offsets = [0, 0, 0], sizes = [2, 3, 16], strides = [1, 1, 1]} : vector<2x6x16xbf16> to vector<2x3x16xbf16>
    %91 = tpu.concatenate %89, %90 in 1 : vector<2x3x16xbf16>, vector<2x3x16xbf16> -> vector<2x6x16xbf16>
    %92 = vector.extract_strided_slice %83 {offsets = [0, 0, 0], sizes = [2, 6, 16], strides = [1, 1, 1]} : vector<2x24x16xbf16> to vector<2x6x16xbf16>
    %93 = vector.extract_strided_slice %83 {offsets = [0, 6, 0], sizes = [2, 6, 16], strides = [1, 1, 1]} : vector<2x24x16xbf16> to vector<2x6x16xbf16>
    %94 = tpu.concatenate %87, %91, %92, %93 in 1 : vector<2x6x16xbf16>, vector<2x6x16xbf16>, vector<2x6x16xbf16>, vector<2x6x16xbf16> -> vector<2x24x16xbf16>
    %95 = vector.extract_strided_slice %21 {offsets = [0, 24, 0], sizes = [2, 24, 16], strides = [1, 1, 1]} : vector<2x96x16xbf16> to vector<2x24x16xbf16>
    %96 = vector.extract_strided_slice %95 {offsets = [0, 6, 0], sizes = [2, 6, 16], strides = [1, 1, 1]} : vector<2x24x16xbf16> to vector<2x6x16xbf16>
    %cst_20 = arith.constant 0.000000e+00 : bf16
    %97 = vector.broadcast %cst_20 : bf16 to vector<2x1x16xbf16>
    %98 = vector.extract_strided_slice %96 {offsets = [0, 0, 0], sizes = [2, 5, 16], strides = [1, 1, 1]} : vector<2x6x16xbf16> to vector<2x5x16xbf16>
    %99 = tpu.concatenate %97, %98 in 1 : vector<2x1x16xbf16>, vector<2x5x16xbf16> -> vector<2x6x16xbf16>
    %100 = vector.broadcast %43 : vector<1x6x1xbf16> to vector<2x6x16xbf16>
    %101 = arith.mulf %99, %100 : vector<2x6x16xbf16>
    %102 = vector.extract_strided_slice %95 {offsets = [0, 0, 0], sizes = [2, 6, 16], strides = [1, 1, 1]} : vector<2x24x16xbf16> to vector<2x6x16xbf16>
    %103 = vector.extract_strided_slice %95 {offsets = [0, 18, 0], sizes = [2, 6, 16], strides = [1, 1, 1]} : vector<2x24x16xbf16> to vector<2x6x16xbf16>
    %cst_21 = arith.constant 0.000000e+00 : bf16
    %104 = vector.broadcast %cst_21 : bf16 to vector<2x1x16xbf16>
    %105 = vector.extract_strided_slice %103 {offsets = [0, 0, 0], sizes = [2, 5, 16], strides = [1, 1, 1]} : vector<2x6x16xbf16> to vector<2x5x16xbf16>
    %106 = tpu.concatenate %104, %105 in 1 : vector<2x1x16xbf16>, vector<2x5x16xbf16> -> vector<2x6x16xbf16>
    %107 = vector.broadcast %43 : vector<1x6x1xbf16> to vector<2x6x16xbf16>
    %108 = arith.mulf %106, %107 : vector<2x6x16xbf16>
    %109 = vector.extract_strided_slice %95 {offsets = [0, 12, 0], sizes = [2, 6, 16], strides = [1, 1, 1]} : vector<2x24x16xbf16> to vector<2x6x16xbf16>
    %110 = tpu.concatenate %101, %102, %108, %109 in 1 : vector<2x6x16xbf16>, vector<2x6x16xbf16>, vector<2x6x16xbf16>, vector<2x6x16xbf16> -> vector<2x24x16xbf16>
    %111 = vector.extract_strided_slice %21 {offsets = [0, 0, 0], sizes = [2, 24, 16], strides = [1, 1, 1]} : vector<2x96x16xbf16> to vector<2x24x16xbf16>
    %112 = vector.extract_strided_slice %21 {offsets = [0, 24, 0], sizes = [2, 24, 16], strides = [1, 1, 1]} : vector<2x96x16xbf16> to vector<2x24x16xbf16>
    %113 = vector.extract_strided_slice %21 {offsets = [0, 72, 0], sizes = [2, 24, 16], strides = [1, 1, 1]} : vector<2x96x16xbf16> to vector<2x24x16xbf16>
    %114 = vector.extract_strided_slice %113 {offsets = [0, 6, 0], sizes = [2, 6, 16], strides = [1, 1, 1]} : vector<2x24x16xbf16> to vector<2x6x16xbf16>
    %cst_22 = arith.constant 0.000000e+00 : bf16
    %115 = vector.broadcast %cst_22 : bf16 to vector<2x1x16xbf16>
    %116 = vector.extract_strided_slice %114 {offsets = [0, 0, 0], sizes = [2, 5, 16], strides = [1, 1, 1]} : vector<2x6x16xbf16> to vector<2x5x16xbf16>
    %117 = tpu.concatenate %115, %116 in 1 : vector<2x1x16xbf16>, vector<2x5x16xbf16> -> vector<2x6x16xbf16>
    %118 = vector.broadcast %43 : vector<1x6x1xbf16> to vector<2x6x16xbf16>
    %119 = arith.mulf %117, %118 : vector<2x6x16xbf16>
    %120 = vector.extract_strided_slice %113 {offsets = [0, 0, 0], sizes = [2, 6, 16], strides = [1, 1, 1]} : vector<2x24x16xbf16> to vector<2x6x16xbf16>
    %121 = vector.extract_strided_slice %113 {offsets = [0, 18, 0], sizes = [2, 6, 16], strides = [1, 1, 1]} : vector<2x24x16xbf16> to vector<2x6x16xbf16>
    %cst_23 = arith.constant 0.000000e+00 : bf16
    %122 = vector.broadcast %cst_23 : bf16 to vector<2x1x16xbf16>
    %123 = vector.extract_strided_slice %121 {offsets = [0, 0, 0], sizes = [2, 5, 16], strides = [1, 1, 1]} : vector<2x6x16xbf16> to vector<2x5x16xbf16>
    %124 = tpu.concatenate %122, %123 in 1 : vector<2x1x16xbf16>, vector<2x5x16xbf16> -> vector<2x6x16xbf16>
    %125 = vector.broadcast %43 : vector<1x6x1xbf16> to vector<2x6x16xbf16>
    %126 = arith.mulf %124, %125 : vector<2x6x16xbf16>
    %127 = vector.extract_strided_slice %113 {offsets = [0, 12, 0], sizes = [2, 6, 16], strides = [1, 1, 1]} : vector<2x24x16xbf16> to vector<2x6x16xbf16>
    %128 = tpu.concatenate %119, %120, %126, %127 in 1 : vector<2x6x16xbf16>, vector<2x6x16xbf16>, vector<2x6x16xbf16>, vector<2x6x16xbf16> -> vector<2x24x16xbf16>
    %129 = vector.extract_strided_slice %21 {offsets = [0, 48, 0], sizes = [2, 24, 16], strides = [1, 1, 1]} : vector<2x96x16xbf16> to vector<2x24x16xbf16>
    %130 = vector.extract_strided_slice %21 {offsets = [0, 72, 0], sizes = [2, 24, 16], strides = [1, 1, 1]} : vector<2x96x16xbf16> to vector<2x24x16xbf16>
    %131 = tpu.concatenate %70, %82, %94, %110, %111, %112, %128, %129, %130 in 2 : vector<2x24x16xbf16>, vector<2x24x16xbf16>, vector<2x24x16xbf16>, vector<2x24x16xbf16>, vector<2x24x16xbf16>, vector<2x24x16xbf16>, vector<2x24x16xbf16>, vector<2x24x16xbf16>, vector<2x24x16xbf16> -> vector<2x24x144xbf16>
    %132 = vector.shape_cast %131 : vector<2x24x144xbf16> to vector<48x144xbf16>
    %c0_24 = arith.constant 0 : index
    %c0_25 = arith.constant 0 : index
    %133 = vector.load %arg4[%c0_24, %c0_25] : memref<144x32xbf16, #tpu.memory_space<vmem>>, vector<144x32xbf16>
    %cst_26 = arith.constant dense<0.000000e+00> : vector<48x32xf32>
    %134 = tpu.matmul %132, %133, %cst_26 {dimension_numbers = #tpu.dot_dimension_numbers<[1], [0], [0], [1], [0, 0, 1, 1], [], []>} : vector<48x144xbf16>, vector<144x32xbf16>, vector<48x32xf32> -> vector<48x32xf32>
    %c0_27 = arith.constant 0 : index
    %c0_28 = arith.constant 0 : index
    %135 = vector.load %arg5[%c0_27, %c0_28] : memref<1x32xf32, #tpu.memory_space<vmem>>, vector<1x32xf32>
    %136 = vector.broadcast %135 : vector<1x32xf32> to vector<48x32xf32>
    %137 = arith.addf %134, %136 : vector<48x32xf32>
    %cst_29 = arith.constant 0.000000e+00 : f32
    %138 = vector.broadcast %cst_29 : f32 to vector<48x32xf32>
    %139 = arith.maximumf %137, %138 : vector<48x32xf32>
    %140 = arith.truncf %139 : vector<48x32xf32> to vector<48x32xbf16>
    %141 = vector.shape_cast %140 : vector<48x32xbf16> to vector<2x24x32xbf16>
    %142 = vector.extract_strided_slice %141 {offsets = [0, 18, 0], sizes = [2, 6, 32], strides = [1, 1, 1]} : vector<2x24x32xbf16> to vector<2x6x32xbf16>
    %cst_30 = arith.constant 0.000000e+00 : bf16
    %143 = vector.broadcast %cst_30 : bf16 to vector<2x1x32xbf16>
    %144 = vector.extract_strided_slice %142 {offsets = [0, 0, 0], sizes = [2, 5, 32], strides = [1, 1, 1]} : vector<2x6x32xbf16> to vector<2x5x32xbf16>
    %145 = tpu.concatenate %143, %144 in 1 : vector<2x1x32xbf16>, vector<2x5x32xbf16> -> vector<2x6x32xbf16>
    %146 = vector.broadcast %43 : vector<1x6x1xbf16> to vector<2x6x32xbf16>
    %147 = arith.mulf %145, %146 : vector<2x6x32xbf16>
    %cst_31 = arith.constant 0.000000e+00 : bf16
    %148 = vector.broadcast %cst_31 : bf16 to vector<2x3x32xbf16>
    %149 = vector.extract_strided_slice %147 {offsets = [0, 0, 0], sizes = [2, 3, 32], strides = [1, 1, 1]} : vector<2x6x32xbf16> to vector<2x3x32xbf16>
    %150 = tpu.concatenate %148, %149 in 1 : vector<2x3x32xbf16>, vector<2x3x32xbf16> -> vector<2x6x32xbf16>
    %151 = vector.extract_strided_slice %141 {offsets = [0, 12, 0], sizes = [2, 6, 32], strides = [1, 1, 1]} : vector<2x24x32xbf16> to vector<2x6x32xbf16>
    %cst_32 = arith.constant 0.000000e+00 : bf16
    %152 = vector.broadcast %cst_32 : bf16 to vector<2x3x32xbf16>
    %153 = vector.extract_strided_slice %151 {offsets = [0, 0, 0], sizes = [2, 3, 32], strides = [1, 1, 1]} : vector<2x6x32xbf16> to vector<2x3x32xbf16>
    %154 = tpu.concatenate %152, %153 in 1 : vector<2x3x32xbf16>, vector<2x3x32xbf16> -> vector<2x6x32xbf16>
    %155 = vector.extract_strided_slice %141 {offsets = [0, 18, 0], sizes = [2, 6, 32], strides = [1, 1, 1]} : vector<2x24x32xbf16> to vector<2x6x32xbf16>
    %cst_33 = arith.constant 0.000000e+00 : bf16
    %156 = vector.broadcast %cst_33 : bf16 to vector<2x3x32xbf16>
    %157 = vector.extract_strided_slice %155 {offsets = [0, 0, 0], sizes = [2, 3, 32], strides = [1, 1, 1]} : vector<2x6x32xbf16> to vector<2x3x32xbf16>
    %158 = tpu.concatenate %156, %157 in 1 : vector<2x3x32xbf16>, vector<2x3x32xbf16> -> vector<2x6x32xbf16>
    %159 = vector.extract_strided_slice %141 {offsets = [0, 6, 0], sizes = [2, 6, 32], strides = [1, 1, 1]} : vector<2x24x32xbf16> to vector<2x6x32xbf16>
    %cst_34 = arith.constant 0.000000e+00 : bf16
    %160 = vector.broadcast %cst_34 : bf16 to vector<2x1x32xbf16>
    %161 = vector.extract_strided_slice %159 {offsets = [0, 0, 0], sizes = [2, 5, 32], strides = [1, 1, 1]} : vector<2x6x32xbf16> to vector<2x5x32xbf16>
    %162 = tpu.concatenate %160, %161 in 1 : vector<2x1x32xbf16>, vector<2x5x32xbf16> -> vector<2x6x32xbf16>
    %163 = vector.broadcast %43 : vector<1x6x1xbf16> to vector<2x6x32xbf16>
    %164 = arith.mulf %162, %163 : vector<2x6x32xbf16>
    %165 = vector.extract_strided_slice %141 {offsets = [0, 0, 0], sizes = [2, 6, 32], strides = [1, 1, 1]} : vector<2x24x32xbf16> to vector<2x6x32xbf16>
    %166 = vector.extract_strided_slice %141 {offsets = [0, 6, 0], sizes = [2, 6, 32], strides = [1, 1, 1]} : vector<2x24x32xbf16> to vector<2x6x32xbf16>
    %167 = vector.extract_strided_slice %141 {offsets = [0, 18, 0], sizes = [2, 6, 32], strides = [1, 1, 1]} : vector<2x24x32xbf16> to vector<2x6x32xbf16>
    %cst_35 = arith.constant 0.000000e+00 : bf16
    %168 = vector.broadcast %cst_35 : bf16 to vector<2x1x32xbf16>
    %169 = vector.extract_strided_slice %167 {offsets = [0, 0, 0], sizes = [2, 5, 32], strides = [1, 1, 1]} : vector<2x6x32xbf16> to vector<2x5x32xbf16>
    %170 = tpu.concatenate %168, %169 in 1 : vector<2x1x32xbf16>, vector<2x5x32xbf16> -> vector<2x6x32xbf16>
    %171 = vector.broadcast %43 : vector<1x6x1xbf16> to vector<2x6x32xbf16>
    %172 = arith.mulf %170, %171 : vector<2x6x32xbf16>
    %173 = vector.extract_strided_slice %141 {offsets = [0, 12, 0], sizes = [2, 6, 32], strides = [1, 1, 1]} : vector<2x24x32xbf16> to vector<2x6x32xbf16>
    %174 = vector.extract_strided_slice %141 {offsets = [0, 18, 0], sizes = [2, 6, 32], strides = [1, 1, 1]} : vector<2x24x32xbf16> to vector<2x6x32xbf16>
    %175 = tpu.concatenate %150, %154, %158, %164, %165, %166, %172, %173, %174 in 2 : vector<2x6x32xbf16>, vector<2x6x32xbf16>, vector<2x6x32xbf16>, vector<2x6x32xbf16>, vector<2x6x32xbf16>, vector<2x6x32xbf16>, vector<2x6x32xbf16>, vector<2x6x32xbf16>, vector<2x6x32xbf16> -> vector<2x6x288xbf16>
    %cst_36 = arith.constant 0.000000e+00 : bf16
    %176 = vector.broadcast %cst_36 : bf16 to vector<2x2x288xbf16>
    %177 = tpu.concatenate %175, %176 in 1 : vector<2x6x288xbf16>, vector<2x2x288xbf16> -> vector<2x8x288xbf16>
    %178 = vector.shape_cast %177 : vector<2x8x288xbf16> to vector<16x288xbf16>
    %c0_37 = arith.constant 0 : index
    %c0_38 = arith.constant 0 : index
    %179 = vector.load %arg6[%c0_37, %c0_38] : memref<288x64xbf16, #tpu.memory_space<vmem>>, vector<288x64xbf16>
    %cst_39 = arith.constant dense<0.000000e+00> : vector<16x64xf32>
    %180 = tpu.matmul %178, %179, %cst_39 {dimension_numbers = #tpu.dot_dimension_numbers<[1], [0], [0], [1], [0, 0, 1, 1], [], []>} : vector<16x288xbf16>, vector<288x64xbf16>, vector<16x64xf32> -> vector<16x64xf32>
    %c0_40 = arith.constant 0 : index
    %c0_41 = arith.constant 0 : index
    %181 = vector.load %arg7[%c0_40, %c0_41] : memref<1x64xf32, #tpu.memory_space<vmem>>, vector<1x64xf32>
    %182 = vector.broadcast %181 : vector<1x64xf32> to vector<16x64xf32>
    %183 = arith.addf %180, %182 : vector<16x64xf32>
    %cst_42 = arith.constant 0.000000e+00 : f32
    %184 = vector.broadcast %cst_42 : f32 to vector<16x64xf32>
    %185 = arith.maximumf %183, %184 : vector<16x64xf32>
    %186 = vector.shape_cast %185 : vector<16x64xf32> to vector<2x8x64xf32>
    %187 = vector.extract_strided_slice %186 {offsets = [0, 0, 0], sizes = [2, 6, 64], strides = [1, 1, 1]} : vector<2x8x64xf32> to vector<2x6x64xf32>
    %c0_43 = arith.constant 0 : index
    %c0_44 = arith.constant 0 : index
    %c0_45 = arith.constant 0 : index
    %188 = vector.load %arg8[%c0_43, %c0_44, %c0_45] : memref<2x6x64xf32, #tpu.memory_space<vmem>>, vector<2x6x64xf32>
    tpu.vector_store %arg8[%c0_43, %c0_44, %c0_45], %187 {strides = array<i32>} : memref<2x6x64xf32, #tpu.memory_space<vmem>>, vector<2x6x64xf32>,
    return
  }
  func.func @transform_0(%arg0: i32) -> (i32, i32, i32, i32) {
    %c0_i32 = arith.constant 0 : i32
    %c0_i32_0 = arith.constant 0 : i32
    %c0_i32_1 = arith.constant 0 : i32
    %c0_i32_2 = arith.constant 0 : i32
    return %arg0, %c0_i32, %c0_i32_0, %c0_i32_1 : i32, i32, i32, i32
  }
  func.func @transform_1(%arg0: i32) -> (i32, i32) {
    %c0_i32 = arith.constant 0 : i32
    %c0_i32_0 = arith.constant 0 : i32
    %c0_i32_1 = arith.constant 0 : i32
    return %c0_i32, %c0_i32_0 : i32, i32
  }
  func.func @transform_2(%arg0: i32) -> (i32, i32) {
    %c0_i32 = arith.constant 0 : i32
    %c0_i32_0 = arith.constant 0 : i32
    %c0_i32_1 = arith.constant 0 : i32
    return %c0_i32, %c0_i32_0 : i32, i32
  }
  func.func @transform_3(%arg0: i32) -> (i32, i32) {
    %c0_i32 = arith.constant 0 : i32
    %c0_i32_0 = arith.constant 0 : i32
    %c0_i32_1 = arith.constant 0 : i32
    return %c0_i32, %c0_i32_0 : i32, i32
  }
  func.func @transform_4(%arg0: i32) -> (i32, i32) {
    %c0_i32 = arith.constant 0 : i32
    %c0_i32_0 = arith.constant 0 : i32
    %c0_i32_1 = arith.constant 0 : i32
    return %c0_i32, %c0_i32_0 : i32, i32
  }
  func.func @transform_5(%arg0: i32) -> (i32, i32) {
    %c0_i32 = arith.constant 0 : i32
    %c0_i32_0 = arith.constant 0 : i32
    %c0_i32_1 = arith.constant 0 : i32
    return %c0_i32, %c0_i32_0 : i32, i32
  }
  func.func @transform_6(%arg0: i32) -> (i32, i32) {
    %c0_i32 = arith.constant 0 : i32
    %c0_i32_0 = arith.constant 0 : i32
    %c0_i32_1 = arith.constant 0 : i32
    return %c0_i32, %c0_i32_0 : i32, i32
  }
  func.func @transform_7(%arg0: i32) -> (i32, i32, i32) {
    %c0_i32 = arith.constant 0 : i32
    %c0_i32_0 = arith.constant 0 : i32
    %c0_i32_1 = arith.constant 0 : i32
    return %arg0, %c0_i32, %c0_i32_0 : i32, i32, i32
  }
}

</mosaic_0001>

<llo_original>
// kernel: encoder_forward.1
$region0: #{encoder_forward.1}
  #allocation0 [shape = 'u32[]', space=smem, size = 0x4, offset = 0x4, fixed_abs, tag = 'smem constant byte address 0x4 - core index']
  #allocation1 [shape = 'u32[144,128]{1,0:T(1,128)}', space=vmem, size = 0x12000, scoped, tag = 'internal scratch']
  %s0 = inlined_call_operand.hbm [shape: bf16[4,4,96,80], index: 0, kind: input, shape index: {}]
  %s1 = inlined_call_operand.hbm [shape: bf16[80,16], index: 1, kind: input, shape index: {}]
  %s2 = inlined_call_operand.hbm [shape: f32[1,16], index: 2, kind: input, shape index: {}]
  %s3 = inlined_call_operand.hbm [shape: bf16[144,32], index: 3, kind: input, shape index: {}]
  %s4 = inlined_call_operand.hbm [shape: f32[1,32], index: 4, kind: input, shape index: {}]
  %s5 = inlined_call_operand.hbm [shape: bf16[288,64], index: 5, kind: input, shape index: {}]
  %s6 = inlined_call_operand.hbm [shape: f32[1,64], index: 6, kind: input, shape index: {}]
  %s7 = inlined_call_operand.hbm [shape: f32[4,6,64], index: 7, kind: output, shape index: {}]
  %s8 = sld [smem:[#allocation0]]
  $region89: #{encoder_forward.1} parent=0
    _
  %s10 = ssub.s32 1, %s8
  %s11 = scalar_select 0, %s10, %s8
  $region1: #{encoder_forward.1} parent=0
    #allocation2 [shape = 'u8[393216]{0}', space=vmem, size = 0x60000, scoped, tag = 'input window, operand 0']
    #allocation3 [shape = 's32[2]{0}', space=sflag, size = 0x8, scoped, tag = 'scoped memory for encoder_forward.1']
    #allocation4 [shape = 's32[2]{0}', space=sflag, size = 0x8, scoped, tag = 'scoped memory for encoder_forward.1']
    #allocation5 [shape = 'u8[20480]{0}', space=vmem, size = 0x5000, scoped, tag = 'input window, operand 1, single buffered']
    #allocation6 [shape = 's32[1]{0}', space=sflag, size = 0x4, scoped, tag = 'scoped memory for encoder_forward.1']
    #allocation7 [shape = 'u8[512]{0}', space=vmem, size = 0x400, scoped, tag = 'input window, operand 2, single buffered']
    #allocation8 [shape = 'u8[36864]{0}', space=vmem, size = 0x9000, scoped, tag = 'input window, operand 3, single buffered']
    #allocation9 [shape = 's32[1]{0}', space=sflag, size = 0x4, scoped, tag = 'scoped memory for encoder_forward.1']
    #allocation10 [shape = 'u8[512]{0}', space=vmem, size = 0x400, scoped, tag = 'input window, operand 4, single buffered']
    #allocation11 [shape = 'u8[73728]{0}', space=vmem, size = 0x12000, scoped, tag = 'input window, operand 5, single buffered']
    #allocation12 [shape = 's32[1]{0}', space=sflag, size = 0x4, scoped, tag = 'scoped memory for encoder_forward.1']
    #allocation13 [shape = 'u8[512]{0}', space=vmem, size = 0x400, scoped, tag = 'input window, operand 6, single buffered']
    #allocation14 [shape = 'u8[16384]{0}', space=vmem, size = 0x4000, scoped, tag = 'output window, operand 0']
    %12 = vsyncpa [#allocation3], 0
    %s13 = scalar_lea.sflag [#allocation3], 1
    %14 = vsyncpa %s13, 0
    %15 = vsyncpa [#allocation6], 0
    %16 = vsyncpa [#allocation9], 0
    %17 = vsyncpa [#allocation12], 0
    %18 = vsyncpa [#allocation4], 0
    %s19 = scalar_lea.sflag [#allocation4], 1
    %20 = vsyncpa %s19, 0
    loop: start=0, step=1, limit=4
    $region2: #{encoder_forward.1} parent=1 // loop_pre_header
      _
    $region3: #{encoder_forward.1} parent=1 // loop_header
      %s22 = sphi 0, %s26
      %p23 = scmp.ge.s32.totalorder %s22, 4
      %s32 = sphi 0, %s34
      %s35 = sphi 0, %s32
      %s36 = sphi 0, %s35
      %s52 = sphi 0, %s36
      %s56 = sphi 0, %s56
      %s58 = sphi 0, %s56
      %s59 = sphi 0, %s58
      %s73 = sphi 0, %s59
      %s77 = sphi 0, %s77
      %s79 = sphi 0, %s77
      %s80 = sphi 0, %s79
      %s94 = sphi 0, %s80
      %s98 = sphi 0, %s98
      %s100 = sphi 0, %s98
      %s101 = sphi 0, %s100
      %s115 = sphi 0, %s101
      %s119 = sphi 0, %s119
      %s121 = sphi 0, %s119
      %s122 = sphi 0, %s121
      %s136 = sphi 0, %s122
      %s140 = sphi 0, %s140
      %s142 = sphi 0, %s140
      %s143 = sphi 0, %s142
      %s157 = sphi 0, %s143
      %s161 = sphi 0, %s161
      %s163 = sphi 0, %s161
      %s164 = sphi 0, %s163
      %s178 = sphi 0, %s164
      %s184 = sphi 0, %s186
      %s187 = sphi 0, %s184
      %s188 = sphi 0, %s187
      %s204 = sphi 0, %s188
    $region4: #{encoder_forward.1} parent=1 // loop_header_branch
      %25 = sbr.rel (%p23) target = $region8
    $region5: #{encoder_forward.1} parent=1 // loop_body
      %s27 = ssub.s32 %s22, 1
      %s28 = ssub.s32 %s22, 2
      %s29 = sadd.s32 %s22, 1
      %s30 = ssub.s32 %s22, %s29
      %p31 = scmp.eq.s32.totalorder %s30, 0
      %s33 = sadd.s32 %s32, 1
      %s34 = scalar_select %p31, %s32, %s33
      %p37 = pneg %p31
      %p38 = scmp.eq.s32.totalorder %s22, 1
      %p39 = por %p37, %p38
      %p40 = scmp.ne.s32.totalorder %s32, %s35
      %p41 = scmp.eq.s32.totalorder %s22, 0
      %p42 = por %p40, %p41
      %p43 = scmp.ne.s32.totalorder %s32, %s35
      %p44 = scmp.eq.s32.totalorder %s27, 1
      %p45 = por %p43, %p44
      %p46 = scmp.ne.s32.totalorder %s35, %s36
      %p47 = scmp.eq.s32.totalorder %s27, 0
      %p48 = por %p46, %p47
      %p49 = scmp.ne.s32.totalorder %s35, %s36
      %p50 = scmp.eq.s32.totalorder %s28, 1
      %p51 = por %p49, %p50
      %p53 = scmp.ne.s32.totalorder %s36, %s52
      %p54 = scmp.eq.s32.totalorder %s28, 0
      %p55 = por %p53, %p54
      %s57 = sadd.s32 %s56, 1
      %p60 = scmp.eq.s32.totalorder %s22, 1
      %p61 = scmp.ne.s32.totalorder %s56, %s58
      %p62 = scmp.eq.s32.totalorder %s22, 0
      %p63 = por %p61, %p62
      %p64 = scmp.ne.s32.totalorder %s56, %s58
      %p65 = scmp.eq.s32.totalorder %s27, 1
      %p66 = por %p64, %p65
      %p67 = scmp.ne.s32.totalorder %s58, %s59
      %p68 = scmp.eq.s32.totalorder %s27, 0
      %p69 = por %p67, %p68
      %p70 = scmp.ne.s32.totalorder %s58, %s59
      %p71 = scmp.eq.s32.totalorder %s28, 1
      %p72 = por %p70, %p71
      %p74 = scmp.ne.s32.totalorder %s59, %s73
      %p75 = scmp.eq.s32.totalorder %s28, 0
      %p76 = por %p74, %p75
      %s78 = sadd.s32 %s77, 1
      %p81 = scmp.eq.s32.totalorder %s22, 1
      %p82 = scmp.ne.s32.totalorder %s77, %s79
      %p83 = scmp.eq.s32.totalorder %s22, 0
      %p84 = por %p82, %p83
      %p85 = scmp.ne.s32.totalorder %s77, %s79
      %p86 = scmp.eq.s32.totalorder %s27, 1
      %p87 = por %p85, %p86
      %p88 = scmp.ne.s32.totalorder %s79, %s80
      %p89 = scmp.eq.s32.totalorder %s27, 0
      %p90 = por %p88, %p89
      %p91 = scmp.ne.s32.totalorder %s79, %s80
      %p92 = scmp.eq.s32.totalorder %s28, 1
      %p93 = por %p91, %p92
      %p95 = scmp.ne.s32.totalorder %s80, %s94
      %p96 = scmp.eq.s32.totalorder %s28, 0
      %p97 = por %p95, %p96
      %s99 = sadd.s32 %s98, 1
      %p102 = scmp.eq.s32.totalorder %s22, 1
      %p103 = scmp.ne.s32.totalorder %s98, %s100
      %p104 = scmp.eq.s32.totalorder %s22, 0
      %p105 = por %p103, %p104
      %p106 = scmp.ne.s32.totalorder %s98, %s100
      %p107 = scmp.eq.s32.totalorder %s27, 1
      %p108 = por %p106, %p107
      %p109 = scmp.ne.s32.totalorder %s100, %s101
      %p110 = scmp.eq.s32.totalorder %s27, 0
      %p111 = por %p109, %p110
      %p112 = scmp.ne.s32.totalorder %s100, %s101
      %p113 = scmp.eq.s32.totalorder %s28, 1
      %p114 = por %p112, %p113
      %p116 = scmp.ne.s32.totalorder %s101, %s115
      %p117 = scmp.eq.s32.totalorder %s28, 0
      %p118 = por %p116, %p117
      %s120 = sadd.s32 %s119, 1
      %p123 = scmp.eq.s32.totalorder %s22, 1
      %p124 = scmp.ne.s32.totalorder %s119, %s121
      %p125 = scmp.eq.s32.totalorder %s22, 0
      %p126 = por %p124, %p125
      %p127 = scmp.ne.s32.totalorder %s119, %s121
      %p128 = scmp.eq.s32.totalorder %s27, 1
      %p129 = por %p127, %p128
      %p130 = scmp.ne.s32.totalorder %s121, %s122
      %p131 = scmp.eq.s32.totalorder %s27, 0
      %p132 = por %p130, %p131
      %p133 = scmp.ne.s32.totalorder %s121, %s122
      %p134 = scmp.eq.s32.totalorder %s28, 1
      %p135 = por %p133, %p134
      %p137 = scmp.ne.s32.totalorder %s122, %s136
      %p138 = scmp.eq.s32.totalorder %s28, 0
      %p139 = por %p137, %p138
      %s141 = sadd.s32 %s140, 1
      %p144 = scmp.eq.s32.totalorder %s22, 1
      %p145 = scmp.ne.s32.totalorder %s140, %s142
      %p146 = scmp.eq.s32.totalorder %s22, 0
      %p147 = por %p145, %p146
      %p148 = scmp.ne.s32.totalorder %s140, %s142
      %p149 = scmp.eq.s32.totalorder %s27, 1
      %p150 = por %p148, %p149
      %p151 = scmp.ne.s32.totalorder %s142, %s143
      %p152 = scmp.eq.s32.totalorder %s27, 0
      %p153 = por %p151, %p152
      %p154 = scmp.ne.s32.totalorder %s142, %s143
      %p155 = scmp.eq.s32.totalorder %s28, 1
      %p156 = por %p154, %p155
      %p158 = scmp.ne.s32.totalorder %s143, %s157
      %p159 = scmp.eq.s32.totalorder %s28, 0
      %p160 = por %p158, %p159
      %s162 = sadd.s32 %s161, 1
      %p165 = scmp.eq.s32.totalorder %s22, 1
      %p166 = scmp.ne.s32.totalorder %s161, %s163
      %p167 = scmp.eq.s32.totalorder %s22, 0
      %p168 = por %p166, %p167
      %p169 = scmp.ne.s32.totalorder %s161, %s163
      %p170 = scmp.eq.s32.totalorder %s27, 1
      %p171 = por %p169, %p170
      %p172 = scmp.ne.s32.totalorder %s163, %s164
      %p173 = scmp.eq.s32.totalorder %s27, 0
      %p174 = por %p172, %p173
      %p175 = scmp.ne.s32.totalorder %s163, %s164
      %p176 = scmp.eq.s32.totalorder %s28, 1
      %p177 = por %p175, %p176
      %p179 = scmp.ne.s32.totalorder %s164, %s178
      %p180 = scmp.eq.s32.totalorder %s28, 0
      %p181 = por %p179, %p180
      %s182 = ssub.s32 %s22, %s29
      %p183 = scmp.eq.s32.totalorder %s182, 0
      %s185 = sadd.s32 %s184, 1
      %s186 = scalar_select %p183, %s184, %s185
      %p189 = pneg %p183
      %p190 = scmp.eq.s32.totalorder %s22, 1
      %p191 = por %p189, %p190
      %p192 = scmp.ne.s32.totalorder %s184, %s187
      %p193 = scmp.eq.s32.totalorder %s22, 0
      %p194 = por %p192, %p193
      %p195 = scmp.ne.s32.totalorder %s184, %s187
      %p196 = scmp.eq.s32.totalorder %s27, 1
      %p197 = por %p195, %p196
      %p198 = scmp.ne.s32.totalorder %s187, %s188
      %p199 = scmp.eq.s32.totalorder %s27, 0
      %p200 = por %p198, %p199
      %p201 = scmp.ne.s32.totalorder %s187, %s188
      %p202 = scmp.eq.s32.totalorder %s28, 1
      %p203 = por %p201, %p202
      %p205 = scmp.ne.s32.totalorder %s188, %s204
      %p206 = scmp.eq.s32.totalorder %s28, 0
      %p207 = por %p205, %p206
      %p208 = scmp.le.s32.totalorder 1, %s22
      %p209 = scmp.lt.s32.totalorder %s22, 3
      %p210 = pnand %p208, %p209
      %p211 = pneg %p210
      // Predicated region
      $region9: #{encoder_forward.1} parent=5 // pred_check
        _
      $region10: #{encoder_forward.1} parent=5 // pred_check_branch
        %213 = sbr.rel (%p210) target = $region12
      $region11: #{encoder_forward.1} parent=5 // pred_region
        %s214 = ssub.s32 %s22, 1
        // Predicated region
        $region13: #{encoder_forward.1} parent=11 // pred_check
          %p215 = pneg %p69
        $region14: #{encoder_forward.1} parent=11 // pred_check_branch
          %217 = sbr.rel (%p215) target = $region16
        $region15: #{encoder_forward.1} parent=11 // pred_region
          %s219 = ssub.s32 640, 640
          %220 = vsyncadd [#allocation6], %s219
          %s221 = sshll.u32 [#allocation5], 4
          %s222 = int_to_ptr.vmem [resolvable:$true] %s221
          %227 = dma.hbm_to_vmem [thread:$0]  %s1, 640, %s222, [#allocation6], 64, 64, 4
        $region16: #{encoder_forward.1} parent=11 // pred_fallthru
          _
        // Predicated region
        $region17: #{encoder_forward.1} parent=11 // pred_check
          %p228 = pneg %p90
        $region18: #{encoder_forward.1} parent=11 // pred_check_branch
          %230 = sbr.rel (%p228) target = $region20
        $region19: #{encoder_forward.1} parent=11 // pred_region
          %s232 = ssub.s32 16, 16
          %233 = vsyncadd [#allocation6], %s232
          %s235 = sshll.u32 [#allocation7], 4
          %s236 = int_to_ptr.vmem [resolvable:$true] %s235
          %238 = dma.hbm_to_vmem [thread:$0]  %s2, 16, %s236, [#allocation6]
        $region20: #{encoder_forward.1} parent=11 // pred_fallthru
          _
        // Predicated region
        $region21: #{encoder_forward.1} parent=11 // pred_check
          %p239 = pneg %p111
        $region22: #{encoder_forward.1} parent=11 // pred_check_branch
          %241 = sbr.rel (%p239) target = $region24
        $region23: #{encoder_forward.1} parent=11 // pred_region
          %s243 = ssub.s32 1152, 1152
          %244 = vsyncadd [#allocation9], %s243
          %s245 = sshll.u32 [#allocation8], 4
          %s246 = int_to_ptr.vmem [resolvable:$true] %s245
          %251 = dma.hbm_to_vmem [thread:$0]  %s3, 1152, %s246, [#allocation9], 64, 64, 4
        $region24: #{encoder_forward.1} parent=11 // pred_fallthru
          _
        // Predicated region
        $region25: #{encoder_forward.1} parent=11 // pred_check
          %p252 = pneg %p132
        $region26: #{encoder_forward.1} parent=11 // pred_check_branch
          %254 = sbr.rel (%p252) target = $region28
        $region27: #{encoder_forward.1} parent=11 // pred_region
          %s256 = ssub.s32 16, 16
          %257 = vsyncadd [#allocation9], %s256
          %s259 = sshll.u32 [#allocation10], 4
          %s260 = int_to_ptr.vmem [resolvable:$true] %s259
          %262 = dma.hbm_to_vmem [thread:$0]  %s4, 16, %s260, [#allocation9]
        $region28: #{encoder_forward.1} parent=11 // pred_fallthru
          _
        // Predicated region
        $region29: #{encoder_forward.1} parent=11 // pred_check
          %p263 = pneg %p153
        $region30: #{encoder_forward.1} parent=11 // pred_check_branch
          %265 = sbr.rel (%p263) target = $region32
        $region31: #{encoder_forward.1} parent=11 // pred_region
          %s267 = ssub.s32 2304, 2304
          %268 = vsyncadd [#allocation12], %s267
          %s269 = sshll.u32 [#allocation11], 4
          %s270 = int_to_ptr.vmem [resolvable:$true] %s269
          %275 = dma.hbm_to_vmem [thread:$0]  %s5, 2304, %s270, [#allocation12], 64, 64, 4
        $region32: #{encoder_forward.1} parent=11 // pred_fallthru
          _
        // Predicated region
        $region33: #{encoder_forward.1} parent=11 // pred_check
          %p276 = pneg %p174
        $region34: #{encoder_forward.1} parent=11 // pred_check_branch
          %278 = sbr.rel (%p276) target = $region36
        $region35: #{encoder_forward.1} parent=11 // pred_region
          %s280 = ssub.s32 16, 16
          %281 = vsyncadd [#allocation12], %s280
          %s283 = sshll.u32 [#allocation13], 4
          %s284 = int_to_ptr.vmem [resolvable:$true] %s283
          %286 = dma.hbm_to_vmem [thread:$0]  %s6, 16, %s284, [#allocation12]
        $region36: #{encoder_forward.1} parent=11 // pred_fallthru
          _
      $region12: #{encoder_forward.1} parent=5 // pred_fallthru
        _
      %p287 = scmp.lt.s32.totalorder %s22, 2
      // Predicated region
      $region37: #{encoder_forward.1} parent=5 // pred_check
        %p288 = pneg %p287
      $region38: #{encoder_forward.1} parent=5 // pred_check_branch
        %290 = sbr.rel (%p288) target = $region40
      $region39: #{encoder_forward.1} parent=5 // pred_region
        // Predicated region
        $region41: #{encoder_forward.1} parent=39 // pred_check
          %p291 = pneg %p42
        $region42: #{encoder_forward.1} parent=39 // pred_check_branch
          %293 = sbr.rel (%p291) target = $region44
        $region43: #{encoder_forward.1} parent=39 // pred_region
          %s294 = sand.u32 %s32, 1
          %s295 = scalar_lea.sflag [#allocation3], %s294
          %s296 = sand.u32 %s32, 1
          %s297 = smul.addr %s296, 384
          %s298 = scalar_lea.vmem [#allocation2], %s297
          %s299 = smul.u32 2, %s22
          %s301 = ssub.s32 6144, 6144
          %302 = vsyncadd %s295, %s301
          %s303 = smul.addr %s299, 48
          %s304 = smul.addr %s303, 64
          %s305 = scalar_lea.hbm %s0, %s304
          %s306 = sshll.u32 %s298, 4
          %s307 = int_to_ptr.vmem [resolvable:$true] %s306
          %312 = dma.hbm_to_vmem [thread:$0]  %s305, 6144, %s307, %s295, 64, 64, 4
        $region44: #{encoder_forward.1} parent=39 // pred_fallthru
          _
      $region40: #{encoder_forward.1} parent=5 // pred_fallthru
        _
      %p313 = scmp.le.s32.totalorder 1, %s22
      %p314 = scmp.lt.s32.totalorder %s22, 3
      %p315 = pnand %p313, %p314
      %p316 = pneg %p315
      // Predicated region
      $region45: #{encoder_forward.1} parent=5 // pred_check
        _
      $region46: #{encoder_forward.1} parent=5 // pred_check_branch
        %318 = sbr.rel (%p315) target = $region48
      $region47: #{encoder_forward.1} parent=5 // pred_region
        %s319 = ssub.s32 %s22, 1
        %s320 = sand.u32 %s35, 1
        %s321 = scalar_lea.sflag [#allocation3], %s320
        %s322 = sand.u32 %s35, 1
        %s323 = smul.addr %s322, 384
        %s324 = scalar_lea.vmem [#allocation2], %s323
        // Predicated region
        $region49: #{encoder_forward.1} parent=47 // pred_check
          %p325 = pneg %p48
        $region50: #{encoder_forward.1} parent=47 // pred_check_branch
          %327 = sbr.rel (%p325) target = $region52
        $region51: #{encoder_forward.1} parent=47 // pred_region
          %328 = dma.done %s321, 6144
        $region52: #{encoder_forward.1} parent=47 // pred_fallthru
          _
        // Predicated region
        $region53: #{encoder_forward.1} parent=47 // pred_check
          %p329 = pneg %p69
        $region54: #{encoder_forward.1} parent=47 // pred_check_branch
          %331 = sbr.rel (%p329) target = $region56
        $region55: #{encoder_forward.1} parent=47 // pred_region
          %332 = dma.done [#allocation6], 640
        $region56: #{encoder_forward.1} parent=47 // pred_fallthru
          _
        // Predicated region
        $region57: #{encoder_forward.1} parent=47 // pred_check
          %p333 = pneg %p90
        $region58: #{encoder_forward.1} parent=47 // pred_check_branch
          %335 = sbr.rel (%p333) target = $region60
        $region59: #{encoder_forward.1} parent=47 // pred_region
          %336 = dma.done [#allocation6], 16
        $region60: #{encoder_forward.1} parent=47 // pred_fallthru
          _
        // Predicated region
        $region61: #{encoder_forward.1} parent=47 // pred_check
          %p337 = pneg %p111
        $region62: #{encoder_forward.1} parent=47 // pred_check_branch
          %339 = sbr.rel (%p337) target = $region64
        $region63: #{encoder_forward.1} parent=47 // pred_region
          %340 = dma.done [#allocation9], 1152
        $region64: #{encoder_forward.1} parent=47 // pred_fallthru
          _
        // Predicated region
        $region65: #{encoder_forward.1} parent=47 // pred_check
          %p341 = pneg %p132
        $region66: #{encoder_forward.1} parent=47 // pred_check_branch
          %343 = sbr.rel (%p341) target = $region68
        $region67: #{encoder_forward.1} parent=47 // pred_region
          %344 = dma.done [#allocation9], 16
        $region68: #{encoder_forward.1} parent=47 // pred_fallthru
          _
        // Predicated region
        $region69: #{encoder_forward.1} parent=47 // pred_check
          %p345 = pneg %p153
        $region70: #{encoder_forward.1} parent=47 // pred_check_branch
          %347 = sbr.rel (%p345) target = $region72
        $region71: #{encoder_forward.1} parent=47 // pred_region
          %348 = dma.done [#allocation12], 2304
        $region72: #{encoder_forward.1} parent=47 // pred_fallthru
          _
        // Predicated region
        $region73: #{encoder_forward.1} parent=47 // pred_check
          %p349 = pneg %p174
        $region74: #{encoder_forward.1} parent=47 // pred_check_branch
          %351 = sbr.rel (%p349) target = $region76
        $region75: #{encoder_forward.1} parent=47 // pred_region
          %352 = dma.done [#allocation12], 16
        $region76: #{encoder_forward.1} parent=47 // pred_fallthru
          _
        %s353 = sand.u32 %s35, 1
        %s354 = scalar_lea.sflag [#allocation3], %s353
        %s355 = sand.u32 %s35, 1
        %s356 = smul.addr %s355, 384
        %s357 = scalar_lea.vmem [#allocation2], %s356
        %p358 = pneg %p48
        %p359 = pneg %p45
        %p360 = pneg %p69
        %p361 = pneg %p66
        %p362 = pneg %p90
        %p363 = pneg %p87
        %p364 = pneg %p111
        %p365 = pneg %p108
        %p366 = pneg %p132
        %p367 = pneg %p129
        %p368 = pneg %p153
        %p369 = pneg %p150
        %p370 = pneg %p174
        %p371 = pneg %p171
        %p372 = pneg %p200
        %p373 = pneg %p197
        %s374 = sand.u32 %s187, 1
        %s375 = scalar_lea.sflag [#allocation4], %s374
        %s376 = sand.u32 %s187, 1
        %s377 = smul.addr %s376, 16
        %s378 = scalar_lea.vmem [#allocation14], %s377
        %s379 = smul.u32 2, %s27
        %s380 = smul.u32 2, %s27
        %v382 = vld [vmem:[%s324] sm:$0xf]
        %v383 = vld [vmem:[%s324 + $0x4] sm:$0xf]
        %v384 = vld [vmem:[%s324 + $0x8] sm:$0xf]
        %v385 = vld [vmem:[%s324 + $0xc] sm:$0xf]
        %v386 = vld [vmem:[%s324 + $0x10] sm:$0xf]
        %v387 = vld [vmem:[%s324 + $0x14] sm:$0xf]
        %v388 = vld [vmem:[%s324 + $0x18] sm:$0xf]
        %v389 = vld [vmem:[%s324 + $0x1c] sm:$0xf]
        %v390 = vld [vmem:[%s324 + $0x20] sm:$0xf]
        %v391 = vld [vmem:[%s324 + $0x24] sm:$0xf]
        %v392 = vld [vmem:[%s324 + $0x28] sm:$0xf]
        %v393 = vld [vmem:[%s324 + $0x2c] sm:$0xf]
        %v394 = vld [vmem:[%s324 + $0x30] sm:$0xf]
        %v395 = vld [vmem:[%s324 + $0x34] sm:$0xf]
        %v396 = vld [vmem:[%s324 + $0x38] sm:$0xf]
        %v397 = vld [vmem:[%s324 + $0x3c] sm:$0xf]
        %v398 = vld [vmem:[%s324 + $0x40] sm:$0xf]
        %v399 = vld [vmem:[%s324 + $0x44] sm:$0xf]
        %v400 = vld [vmem:[%s324 + $0x48] sm:$0xf]
        %v401 = vld [vmem:[%s324 + $0x4c] sm:$0xf]
        %v402 = vld [vmem:[%s324 + $0x50] sm:$0xf]
        %v403 = vld [vmem:[%s324 + $0x54] sm:$0xf]
        %v404 = vld [vmem:[%s324 + $0x58] sm:$0xf]
        %v405 = vld [vmem:[%s324 + $0x5c] sm:$0xf]
        %v406 = vld [vmem:[%s324 + $0x60] sm:$0xf]
        %v407 = vld [vmem:[%s324 + $0x64] sm:$0xf]
        %v408 = vld [vmem:[%s324 + $0x68] sm:$0xf]
        %v409 = vld [vmem:[%s324 + $0x6c] sm:$0xf]
        %v410 = vld [vmem:[%s324 + $0x70] sm:$0xf]
        %v411 = vld [vmem:[%s324 + $0x74] sm:$0xf]
        %v412 = vld [vmem:[%s324 + $0x78] sm:$0xf]
        %v413 = vld [vmem:[%s324 + $0x7c] sm:$0xf]
        %v414 = vld [vmem:[%s324 + $0x80] sm:$0xf]
        %v415 = vld [vmem:[%s324 + $0x84] sm:$0xf]
        %v416 = vld [vmem:[%s324 + $0x88] sm:$0xf]
        %v417 = vld [vmem:[%s324 + $0x8c] sm:$0xf]
        %v418 = vld [vmem:[%s324 + $0x90] sm:$0xf]
        %v419 = vld [vmem:[%s324 + $0x94] sm:$0xf]
        %v420 = vld [vmem:[%s324 + $0x98] sm:$0xf]
        %v421 = vld [vmem:[%s324 + $0x9c] sm:$0xf]
        %v422 = vld [vmem:[%s324 + $0xa0] sm:$0xf]
        %v423 = vld [vmem:[%s324 + $0xa4] sm:$0xf]
        %v424 = vld [vmem:[%s324 + $0xa8] sm:$0xf]
        %v425 = vld [vmem:[%s324 + $0xac] sm:$0xf]
        %v426 = vld [vmem:[%s324 + $0xb0] sm:$0xf]
        %v427 = vld [vmem:[%s324 + $0xb4] sm:$0xf]
        %v428 = vld [vmem:[%s324 + $0xb8] sm:$0xf]
        %v429 = vld [vmem:[%s324 + $0xbc] sm:$0xf]
        %v430 = vld [vmem:[%s324 + $0xc0] sm:$0xf]
        %v431 = vld [vmem:[%s324 + $0xc4] sm:$0xf]
        %v432 = vld [vmem:[%s324 + $0xc8] sm:$0xf]
        %v433 = vld [vmem:[%s324 + $0xcc] sm:$0xf]
        %v434 = vld [vmem:[%s324 + $0xd0] sm:$0xf]
        %v435 = vld [vmem:[%s324 + $0xd4] sm:$0xf]
        %v436 = vld [vmem:[%s324 + $0xd8] sm:$0xf]
        %v437 = vld [vmem:[%s324 + $0xdc] sm:$0xf]
        %v438 = vld [vmem:[%s324 + $0xe0] sm:$0xf]
        %v439 = vld [vmem:[%s324 + $0xe4] sm:$0xf]
        %v440 = vld [vmem:[%s324 + $0xe8] sm:$0xf]
        %v441 = vld [vmem:[%s324 + $0xec] sm:$0xf]
        %v442 = vld [vmem:[%s324 + $0xf0] sm:$0xf]
        %v443 = vld [vmem:[%s324 + $0xf4] sm:$0xf]
        %v444 = vld [vmem:[%s324 + $0xf8] sm:$0xf]
        %v445 = vld [vmem:[%s324 + $0xfc] sm:$0xf]
        %v446 = vld [vmem:[%s324 + $0x100] sm:$0xf]
        %v447 = vld [vmem:[%s324 + $0x104] sm:$0xf]
        %v448 = vld [vmem:[%s324 + $0x108] sm:$0xf]
        %v449 = vld [vmem:[%s324 + $0x10c] sm:$0xf]
        %v450 = vld [vmem:[%s324 + $0x110] sm:$0xf]
        %v451 = vld [vmem:[%s324 + $0x114] sm:$0xf]
        %v452 = vld [vmem:[%s324 + $0x118] sm:$0xf]
        %v453 = vld [vmem:[%s324 + $0x11c] sm:$0xf]
        %v454 = vld [vmem:[%s324 + $0x120] sm:$0xf]
        %v455 = vld [vmem:[%s324 + $0x124] sm:$0xf]
        %v456 = vld [vmem:[%s324 + $0x128] sm:$0xf]
        %v457 = vld [vmem:[%s324 + $0x12c] sm:$0xf]
        %v458 = vld [vmem:[%s324 + $0x130] sm:$0xf]
        %v459 = vld [vmem:[%s324 + $0x134] sm:$0xf]
        %v460 = vld [vmem:[%s324 + $0x138] sm:$0xf]
        %v461 = vld [vmem:[%s324 + $0x13c] sm:$0xf]
        %v462 = vld [vmem:[%s324 + $0x140] sm:$0xf]
        %v463 = vld [vmem:[%s324 + $0x144] sm:$0xf]
        %v464 = vld [vmem:[%s324 + $0x148] sm:$0xf]
        %v465 = vld [vmem:[%s324 + $0x14c] sm:$0xf]
        %v466 = vld [vmem:[%s324 + $0x150] sm:$0xf]
        %v467 = vld [vmem:[%s324 + $0x154] sm:$0xf]
        %v468 = vld [vmem:[%s324 + $0x158] sm:$0xf]
        %v469 = vld [vmem:[%s324 + $0x15c] sm:$0xf]
        %v470 = vld [vmem:[%s324 + $0x160] sm:$0xf]
        %v471 = vld [vmem:[%s324 + $0x164] sm:$0xf]
        %v472 = vld [vmem:[%s324 + $0x168] sm:$0xf]
        %v473 = vld [vmem:[%s324 + $0x16c] sm:$0xf]
        %v474 = vld [vmem:[%s324 + $0x170] sm:$0xf]
        %v475 = vld [vmem:[%s324 + $0x174] sm:$0xf]
        %v476 = vld [vmem:[%s324 + $0x178] sm:$0xf]
        %v477 = vld [vmem:[%s324 + $0x17c] sm:$0xf]
        %v478 = vld [vmem:[#allocation5] sm:$0xf]
        %v479 = vld [vmem:[#allocation5 + $0x4] sm:$0xf]
        %v480 = vld [vmem:[#allocation5 + $0x8] sm:$0xf]
        %v481 = vld [vmem:[#allocation5 + $0xc] sm:$0xf]
        %v482 = vld [vmem:[#allocation5 + $0x10] sm:$0xf]
        %v483 = vld [vmem:[#allocation5 + $0x14] sm:$0xf]
        %v484 = vld [vmem:[#allocation5 + $0x18] sm:$0xf]
        %v485 = vld [vmem:[#allocation5 + $0x1c] sm:$0xf]
        %v486 = vld [vmem:[#allocation5 + $0x20] sm:$0xf]
        %v487 = vld [vmem:[#allocation5 + $0x24] sm:$0xf]
        %v488 = vld [vmem:[#allocation7] sm:$0x1]
        %v490 = vlaneseq
        %v491 = vshrl.u32 %v490, 7
        %v492 = vsub.s32 0, %v491
        %v493 = vrot.slane %v488, %v492
        %v591 = vunpack.c.l.b16 %v382
        %v592 = vunpack.c.l.b16 %v383
        %v593 = vunpack.c.l.b16 %v384
        %v594 = vunpack.c.l.b16 %v385
        %v595 = vunpack.c.l.b16 %v386
        %v596 = vunpack.c.l.b16 %v387
        %v597 = vunpack.c.l.b16 %v388
        %v598 = vunpack.c.l.b16 %v389
        %v599 = vunpack.c.l.b16 %v390
        %v600 = vunpack.c.l.b16 %v391
        %v601 = vunpack.c.l.b16 %v392
        %v602 = vunpack.c.l.b16 %v393
        %v603 = vunpack.c.l.b16 %v394
        %v604 = vunpack.c.l.b16 %v395
        %v605 = vunpack.c.l.b16 %v396
        %v606 = vunpack.c.l.b16 %v397
        %v607 = vunpack.c.l.b16 %v398
        %v608 = vunpack.c.l.b16 %v399
        %v609 = vunpack.c.l.b16 %v400
        %v610 = vunpack.c.l.b16 %v401
        %v611 = vunpack.c.l.b16 %v402
        %v612 = vunpack.c.l.b16 %v403
        %v613 = vunpack.c.l.b16 %v404
        %v614 = vunpack.c.l.b16 %v405
        %v615 = vunpack.c.l.b16 %v406
        %v616 = vunpack.c.l.b16 %v407
        %v617 = vunpack.c.l.b16 %v408
        %v618 = vunpack.c.l.b16 %v409
        %v619 = vunpack.c.l.b16 %v410
        %v620 = vunpack.c.l.b16 %v411
        %v621 = vunpack.c.l.b16 %v412
        %v622 = vunpack.c.l.b16 %v413
        %v623 = vunpack.c.l.b16 %v414
        %v624 = vunpack.c.l.b16 %v415
        %v625 = vunpack.c.l.b16 %v416
        %v626 = vunpack.c.l.b16 %v417
        %v627 = vunpack.c.l.b16 %v418
        %v628 = vunpack.c.l.b16 %v419
        %v629 = vunpack.c.l.b16 %v420
        %v630 = vunpack.c.l.b16 %v421
        %v631 = vunpack.c.l.b16 %v422
        %v632 = vunpack.c.l.b16 %v423
        %v633 = vunpack.c.l.b16 %v424
        %v634 = vunpack.c.l.b16 %v425
        %v635 = vunpack.c.l.b16 %v426
        %v636 = vunpack.c.l.b16 %v427
        %v637 = vunpack.c.l.b16 %v428
        %v638 = vunpack.c.l.b16 %v429
        %v639 = vunpack.c.l.b16 %v430
        %v640 = vunpack.c.l.b16 %v431
        %v641 = vunpack.c.l.b16 %v432
        %v642 = vunpack.c.l.b16 %v433
        %v643 = vunpack.c.l.b16 %v434
        %v644 = vunpack.c.l.b16 %v435
        %v645 = vunpack.c.l.b16 %v436
        %v646 = vunpack.c.l.b16 %v437
        %v647 = vunpack.c.l.b16 %v438
        %v648 = vunpack.c.l.b16 %v439
        %v649 = vunpack.c.l.b16 %v440
        %v650 = vunpack.c.l.b16 %v441
        %v651 = vunpack.c.l.b16 %v442
        %v652 = vunpack.c.l.b16 %v443
        %v653 = vunpack.c.l.b16 %v444
        %v654 = vunpack.c.l.b16 %v445
        %v655 = vunpack.c.l.b16 %v446
        %v656 = vunpack.c.l.b16 %v447
        %v657 = vunpack.c.l.b16 %v448
        %v658 = vunpack.c.l.b16 %v449
        %v659 = vunpack.c.l.b16 %v450
        %v660 = vunpack.c.l.b16 %v451
        %v661 = vunpack.c.l.b16 %v452
        %v662 = vunpack.c.l.b16 %v453
        %v663 = vunpack.c.l.b16 %v454
        %v664 = vunpack.c.l.b16 %v455
        %v665 = vunpack.c.l.b16 %v456
        %v666 = vunpack.c.l.b16 %v457
        %v667 = vunpack.c.l.b16 %v458
        %v668 = vunpack.c.l.b16 %v459
        %v669 = vunpack.c.l.b16 %v460
        %v670 = vunpack.c.l.b16 %v461
        %v671 = vunpack.c.l.b16 %v462
        %v672 = vunpack.c.l.b16 %v463
        %v673 = vunpack.c.l.b16 %v464
        %v674 = vunpack.c.l.b16 %v465
        %v675 = vunpack.c.l.b16 %v466
        %v676 = vunpack.c.l.b16 %v467
        %v677 = vunpack.c.l.b16 %v468
        %v678 = vunpack.c.l.b16 %v469
        %v679 = vunpack.c.l.b16 %v470
        %v680 = vunpack.c.l.b16 %v471
        %v681 = vunpack.c.l.b16 %v472
        %v682 = vunpack.c.l.b16 %v473
        %v683 = vunpack.c.l.b16 %v474
        %v684 = vunpack.c.l.b16 %v475
        %v685 = vunpack.c.l.b16 %v476
        %v686 = vunpack.c.l.b16 %v477
        %v687 = vpack.c.b16 %v592, %v591
        %v688 = vpack.c.b16 %v594, %v593
        %v689 = vpack.c.b16 %v596, %v595
        %v690 = vpack.c.b16 %v598, %v597
        %v691 = vpack.c.b16 %v600, %v599
        %v692 = vpack.c.b16 %v602, %v601
        %v693 = vpack.c.b16 %v604, %v603
        %v694 = vpack.c.b16 %v606, %v605
        %v695 = vpack.c.b16 %v608, %v607
        %v696 = vpack.c.b16 %v610, %v609
        %v697 = vpack.c.b16 %v612, %v611
        %v698 = vpack.c.b16 %v614, %v613
        %v699 = vpack.c.b16 %v616, %v615
        %v700 = vpack.c.b16 %v618, %v617
        %v701 = vpack.c.b16 %v620, %v619
        %v702 = vpack.c.b16 %v622, %v621
        %v703 = vpack.c.b16 %v624, %v623
        %v704 = vpack.c.b16 %v626, %v625
        %v705 = vpack.c.b16 %v628, %v627
        %v706 = vpack.c.b16 %v630, %v629
        %v707 = vpack.c.b16 %v632, %v631
        %v708 = vpack.c.b16 %v634, %v633
        %v709 = vpack.c.b16 %v636, %v635
        %v710 = vpack.c.b16 %v638, %v637
        %v711 = vpack.c.b16 %v640, %v639
        %v712 = vpack.c.b16 %v642, %v641
        %v713 = vpack.c.b16 %v644, %v643
        %v714 = vpack.c.b16 %v646, %v645
        %v715 = vpack.c.b16 %v648, %v647
        %v716 = vpack.c.b16 %v650, %v649
        %v717 = vpack.c.b16 %v652, %v651
        %v718 = vpack.c.b16 %v654, %v653
        %v719 = vpack.c.b16 %v656, %v655
        %v720 = vpack.c.b16 %v658, %v657
        %v721 = vpack.c.b16 %v660, %v659
        %v722 = vpack.c.b16 %v662, %v661
        %v723 = vpack.c.b16 %v664, %v663
        %v724 = vpack.c.b16 %v666, %v665
        %v725 = vpack.c.b16 %v668, %v667
        %v726 = vpack.c.b16 %v670, %v669
        %v727 = vpack.c.b16 %v672, %v671
        %v728 = vpack.c.b16 %v674, %v673
        %v729 = vpack.c.b16 %v676, %v675
        %v730 = vpack.c.b16 %v678, %v677
        %v731 = vpack.c.b16 %v680, %v679
        %v732 = vpack.c.b16 %v682, %v681
        %v733 = vpack.c.b16 %v684, %v683
        %v734 = vpack.c.b16 %v686, %v685
        %v745 = vunpack.c.l.b16 %v478
        %v746 = vunpack.c.l.b16 %v479
        %v747 = vunpack.c.l.b16 %v480
        %v748 = vunpack.c.l.b16 %v481
        %v749 = vunpack.c.l.b16 %v482
        %v750 = vunpack.c.l.b16 %v483
        %v751 = vunpack.c.l.b16 %v484
        %v752 = vunpack.c.l.b16 %v485
        %v753 = vunpack.c.l.b16 %v486
        %v754 = vunpack.c.l.b16 %v487
        %v755 = vpack.c.b16 %v746, %v745
        %v756 = vpack.c.b16 %v748, %v747
        %v757 = vpack.c.b16 %v750, %v749
        %v758 = vpack.c.b16 %v752, %v751
        %v759 = vpack.c.b16 %v754, %v753
        %vm765 = vcmask 654336
        %v767 = vsel %vm765, %v687, 0
        %v770 = vsel %vm765, %v688, 0
        %v773 = vsel %vm765, %v689, 0
        %v776 = vsel %vm765, %v690, 0
        %v779 = vsel %vm765, %v691, 0
        %v782 = vsel %vm765, %v692, 0
        %v785 = vsel %vm765, %v693, 0
        %v788 = vsel %vm765, %v694, 0
        %v791 = vsel %vm765, %v695, 0
        %v794 = vsel %vm765, %v696, 0
        %v797 = vsel %vm765, %v697, 0
        %v800 = vsel %vm765, %v698, 0
        %v803 = vsel %vm765, %v699, 0
        %v806 = vsel %vm765, %v700, 0
        %v809 = vsel %vm765, %v701, 0
        %v812 = vsel %vm765, %v702, 0
        %v815 = vsel %vm765, %v703, 0
        %v818 = vsel %vm765, %v704, 0
        %v821 = vsel %vm765, %v705, 0
        %v824 = vsel %vm765, %v706, 0
        %v827 = vsel %vm765, %v707, 0
        %v830 = vsel %vm765, %v708, 0
        %v833 = vsel %vm765, %v709, 0
        %v836 = vsel %vm765, %v710, 0
        %v839 = vsel %vm765, %v711, 0
        %v842 = vsel %vm765, %v712, 0
        %v845 = vsel %vm765, %v713, 0
        %v848 = vsel %vm765, %v714, 0
        %v851 = vsel %vm765, %v715, 0
        %v854 = vsel %vm765, %v716, 0
        %v857 = vsel %vm765, %v717, 0
        %v860 = vsel %vm765, %v718, 0
        %v863 = vsel %vm765, %v719, 0
        %v866 = vsel %vm765, %v720, 0
        %v869 = vsel %vm765, %v721, 0
        %v872 = vsel %vm765, %v722, 0
        %v875 = vsel %vm765, %v723, 0
        %v878 = vsel %vm765, %v724, 0
        %v881 = vsel %vm765, %v725, 0
        %v884 = vsel %vm765, %v726, 0
        %v887 = vsel %vm765, %v727, 0
        %v890 = vsel %vm765, %v728, 0
        %v893 = vsel %vm765, %v729, 0
        %v896 = vsel %vm765, %v730, 0
        %v899 = vsel %vm765, %v731, 0
        %v902 = vsel %vm765, %v732, 0
        %v905 = vsel %vm765, %v733, 0
        %v908 = vsel %vm765, %v734, 0
        %910 = vmatprep.subr.bf16.mxu0 0
        %911 = vmatpush1.bf16.msra.mxu0 %v755
        %912 = vmatprep.subr.bf16.mxu0 0
        %913 = vmatpush1.bf16.msra.mxu0 %v756
        %914 = vmatprep.subr.bf16.mxu0 0
        %915 = vmatpush1.bf16.msra.mxu0 %v757
        %916 = vmatprep.subr.bf16.mxu0 0
        %917 = vmatpush1.bf16.msra.mxu0 %v758
        %918 = vmatprep.subr.bf16.mxu0 0
        %919 = vmatpush1.bf16.msra.mxu0 %v759
        %920 = vmatprep.subr.bf16.mxu0 0
        %921 = vmatpush1.bf16.msra.mxu0 0
        %922 = vmatprep.subr.bf16.mxu0 0
        %923 = vmatpush1.bf16.msra.mxu0 0
        %924 = vmatprep.subr.bf16.mxu0 0
        %925 = vmatpush1.bf16.msra.mxu0 0
        %926 = vmatprep.subr.bf16.mxu0 0
        %927 = vmatpush1.bf16.msra.mxu0 0
        %928 = vmatprep.subr.bf16.mxu0 0
        %929 = vmatpush1.bf16.msra.mxu0 0
        %930 = vmatprep.subr.bf16.mxu0 0
        %931 = vmatpush1.bf16.msra.mxu0 0
        %932 = vmatprep.subr.bf16.mxu0 0
        %933 = vmatpush1.bf16.msra.mxu0 0
        %934 = vmatprep.subr.bf16.mxu0 0
        %935 = vmatpush1.bf16.msra.mxu0 0
        %936 = vmatprep.subr.bf16.mxu0 0
        %937 = vmatpush1.bf16.msra.mxu0 0
        %938 = vmatprep.subr.bf16.mxu0 0
        %939 = vmatpush1.bf16.msra.mxu0 0
        %940 = vmatprep.subr.bf16.mxu0 0
        %941 = vmatpush1.bf16.msra.mxu0 0
        %942 = vmatprep.mubr.bf16.mxu0 0
        %943 = vmatmul.mubr.bf16.gmra.mrb[0].mxu0 %v767
        %v944 = vpop.f32.mrb[0].mxu0
        %v945 = vadd.f32 %v493, %v944
        %v946 = vpop.f32.mrb[0].mxu0
        %v947 = vpop.f32.mrb[0].mxu0
        %v948 = vadd.f32 %v493, %v947
        %v949 = vpop.f32.mrb[0].mxu0
        %950 = vmatprep.mubr.bf16.mxu0 0
        %951 = vmatmul.mubr.bf16.gmra.mrb[0].mxu0 %v770
        %v952 = vpop.f32.mrb[0].mxu0
        %v953 = vadd.f32 %v493, %v952
        %v954 = vpop.f32.mrb[0].mxu0
        %v955 = vpop.f32.mrb[0].mxu0
        %v956 = vadd.f32 %v493, %v955
        %v957 = vpop.f32.mrb[0].mxu0
        %958 = vmatprep.mubr.bf16.mxu0 0
        %959 = vmatmul.mubr.bf16.gmra.mrb[0].mxu0 %v773
        %v960 = vpop.f32.mrb[0].mxu0
        %v961 = vadd.f32 %v493, %v960
        %v962 = vpop.f32.mrb[0].mxu0
        %v963 = vpop.f32.mrb[0].mxu0
        %v964 = vadd.f32 %v493, %v963
        %v965 = vpop.f32.mrb[0].mxu0
        %966 = vmatprep.mubr.bf16.mxu0 0
        %967 = vmatmul.mubr.bf16.gmra.mrb[0].mxu0 %v776
        %v968 = vpop.f32.mrb[0].mxu0
        %v969 = vadd.f32 %v493, %v968
        %v970 = vpop.f32.mrb[0].mxu0
        %v971 = vpop.f32.mrb[0].mxu0
        %v972 = vadd.f32 %v493, %v971
        %v973 = vpop.f32.mrb[0].mxu0
        %974 = vmatprep.mubr.bf16.mxu0 0
        %975 = vmatmul.mubr.bf16.gmra.mrb[0].mxu0 %v779
        %v976 = vpop.f32.mrb[0].mxu0
        %v977 = vadd.f32 %v493, %v976
        %v978 = vpop.f32.mrb[0].mxu0
        %v979 = vpop.f32.mrb[0].mxu0
        %v980 = vadd.f32 %v493, %v979
        %v981 = vpop.f32.mrb[0].mxu0
        %982 = vmatprep.mubr.bf16.mxu0 0
        %983 = vmatmul.mubr.bf16.gmra.mrb[0].mxu0 %v782
        %v984 = vpop.f32.mrb[0].mxu0
        %v985 = vadd.f32 %v493, %v984
        %v986 = vpop.f32.mrb[0].mxu0
        %v987 = vpop.f32.mrb[0].mxu0
        %v988 = vadd.f32 %v493, %v987
        %v989 = vpop.f32.mrb[0].mxu0
        %990 = vmatprep.mubr.bf16.mxu0 0
        %991 = vmatmul.mubr.bf16.gmra.mrb[0].mxu0 %v785
        %v992 = vpop.f32.mrb[0].mxu0
        %v993 = vadd.f32 %v493, %v992
        %v994 = vpop.f32.mrb[0].mxu0
        %v995 = vpop.f32.mrb[0].mxu0
        %v996 = vadd.f32 %v493, %v995
        %v997 = vpop.f32.mrb[0].mxu0
        %998 = vmatprep.mubr.bf16.mxu0 0
        %999 = vmatmul.mubr.bf16.gmra.mrb[0].mxu0 %v788
        %v1000 = vpop.f32.mrb[0].mxu0
        %v1001 = vadd.f32 %v493, %v1000
        %v1002 = vpop.f32.mrb[0].mxu0
        %v1003 = vpop.f32.mrb[0].mxu0
        %v1004 = vadd.f32 %v493, %v1003
        %v1005 = vpop.f32.mrb[0].mxu0
        %1006 = vmatprep.mubr.bf16.mxu0 0
        %1007 = vmatmul.mubr.bf16.gmra.mrb[0].mxu0 %v791
        %v1008 = vpop.f32.mrb[0].mxu0
        %v1009 = vadd.f32 %v493, %v1008
        %v1010 = vpop.f32.mrb[0].mxu0
        %v1011 = vpop.f32.mrb[0].mxu0
        %v1012 = vadd.f32 %v493, %v1011
        %v1013 = vpop.f32.mrb[0].mxu0
        %1014 = vmatprep.mubr.bf16.mxu0 0
        %1015 = vmatmul.mubr.bf16.gmra.mrb[0].mxu0 %v794
        %v1016 = vpop.f32.mrb[0].mxu0
        %v1017 = vadd.f32 %v493, %v1016
        %v1018 = vpop.f32.mrb[0].mxu0
        %v1019 = vpop.f32.mrb[0].mxu0
        %v1020 = vadd.f32 %v493, %v1019
        %v1021 = vpop.f32.mrb[0].mxu0
        %1022 = vmatprep.mubr.bf16.mxu0 0
        %1023 = vmatmul.mubr.bf16.gmra.mrb[0].mxu0 %v797
        %v1024 = vpop.f32.mrb[0].mxu0
        %v1025 = vadd.f32 %v493, %v1024
        %v1026 = vpop.f32.mrb[0].mxu0
        %v1027 = vpop.f32.mrb[0].mxu0
        %v1028 = vadd.f32 %v493, %v1027
        %v1029 = vpop.f32.mrb[0].mxu0
        %1030 = vmatprep.mubr.bf16.mxu0 0
        %1031 = vmatmul.mubr.bf16.gmra.mrb[0].mxu0 %v800
        %v1032 = vpop.f32.mrb[0].mxu0
        %v1033 = vadd.f32 %v493, %v1032
        %v1034 = vpop.f32.mrb[0].mxu0
        %v1035 = vpop.f32.mrb[0].mxu0
        %v1036 = vadd.f32 %v493, %v1035
        %v1037 = vpop.f32.mrb[0].mxu0
        %1038 = vmatprep.mubr.bf16.mxu0 0
        %1039 = vmatmul.mubr.bf16.gmra.mrb[0].mxu0 %v803
        %v1040 = vpop.f32.mrb[0].mxu0
        %v1041 = vadd.f32 %v493, %v1040
        %v1042 = vpop.f32.mrb[0].mxu0
        %v1043 = vpop.f32.mrb[0].mxu0
        %v1044 = vadd.f32 %v493, %v1043
        %v1045 = vpop.f32.mrb[0].mxu0
        %1046 = vmatprep.mubr.bf16.mxu0 0
        %1047 = vmatmul.mubr.bf16.gmra.mrb[0].mxu0 %v806
        %v1048 = vpop.f32.mrb[0].mxu0
        %v1049 = vadd.f32 %v493, %v1048
        %v1050 = vpop.f32.mrb[0].mxu0
        %v1051 = vpop.f32.mrb[0].mxu0
        %v1052 = vadd.f32 %v493, %v1051
        %v1053 = vpop.f32.mrb[0].mxu0
        %1054 = vmatprep.mubr.bf16.mxu0 0
        %1055 = vmatmul.mubr.bf16.gmra.mrb[0].mxu0 %v809
        %v1056 = vpop.f32.mrb[0].mxu0
        %v1057 = vadd.f32 %v493, %v1056
        %v1058 = vpop.f32.mrb[0].mxu0
        %v1059 = vpop.f32.mrb[0].mxu0
        %v1060 = vadd.f32 %v493, %v1059
        %v1061 = vpop.f32.mrb[0].mxu0
        %1062 = vmatprep.mubr.bf16.mxu0 0
        %1063 = vmatmul.mubr.bf16.gmra.mrb[0].mxu0 %v812
        %v1064 = vpop.f32.mrb[0].mxu0
        %v1065 = vadd.f32 %v493, %v1064
        %v1066 = vpop.f32.mrb[0].mxu0
        %v1067 = vpop.f32.mrb[0].mxu0
        %v1068 = vadd.f32 %v493, %v1067
        %v1069 = vpop.f32.mrb[0].mxu0
        %1070 = vmatprep.mubr.bf16.mxu0 0
        %1071 = vmatmul.mubr.bf16.gmra.mrb[0].mxu0 %v815
        %v1072 = vpop.f32.mrb[0].mxu0
        %v1073 = vadd.f32 %v493, %v1072
        %v1074 = vpop.f32.mrb[0].mxu0
        %v1075 = vpop.f32.mrb[0].mxu0
        %v1076 = vadd.f32 %v493, %v1075
        %v1077 = vpop.f32.mrb[0].mxu0
        %1078 = vmatprep.mubr.bf16.mxu0 0
        %1079 = vmatmul.mubr.bf16.gmra.mrb[0].mxu0 %v818
        %v1080 = vpop.f32.mrb[0].mxu0
        %v1081 = vadd.f32 %v493, %v1080
        %v1082 = vpop.f32.mrb[0].mxu0
        %v1083 = vpop.f32.mrb[0].mxu0
        %v1084 = vadd.f32 %v493, %v1083
        %v1085 = vpop.f32.mrb[0].mxu0
        %1086 = vmatprep.mubr.bf16.mxu0 0
        %1087 = vmatmul.mubr.bf16.gmra.mrb[0].mxu0 %v821
        %v1088 = vpop.f32.mrb[0].mxu0
        %v1089 = vadd.f32 %v493, %v1088
        %v1090 = vpop.f32.mrb[0].mxu0
        %v1091 = vpop.f32.mrb[0].mxu0
        %v1092 = vadd.f32 %v493, %v1091
        %v1093 = vpop.f32.mrb[0].mxu0
        %1094 = vmatprep.mubr.bf16.mxu0 0
        %1095 = vmatmul.mubr.bf16.gmra.mrb[0].mxu0 %v824
        %v1096 = vpop.f32.mrb[0].mxu0
        %v1097 = vadd.f32 %v493, %v1096
        %v1098 = vpop.f32.mrb[0].mxu0
        %v1099 = vpop.f32.mrb[0].mxu0
        %v1100 = vadd.f32 %v493, %v1099
        %v1101 = vpop.f32.mrb[0].mxu0
        %1102 = vmatprep.mubr.bf16.mxu0 0
        %1103 = vmatmul.mubr.bf16.gmra.mrb[0].mxu0 %v827
        %v1104 = vpop.f32.mrb[0].mxu0
        %v1105 = vadd.f32 %v493, %v1104
        %v1106 = vpop.f32.mrb[0].mxu0
        %v1107 = vpop.f32.mrb[0].mxu0
        %v1108 = vadd.f32 %v493, %v1107
        %v1109 = vpop.f32.mrb[0].mxu0
        %1110 = vmatprep.mubr.bf16.mxu0 0
        %1111 = vmatmul.mubr.bf16.gmra.mrb[0].mxu0 %v830
        %v1112 = vpop.f32.mrb[0].mxu0
        %v1113 = vadd.f32 %v493, %v1112
        %v1114 = vpop.f32.mrb[0].mxu0
        %v1115 = vpop.f32.mrb[0].mxu0
        %v1116 = vadd.f32 %v493, %v1115
        %v1117 = vpop.f32.mrb[0].mxu0
        %1118 = vmatprep.mubr.bf16.mxu0 0
        %1119 = vmatmul.mubr.bf16.gmra.mrb[0].mxu0 %v833
        %v1120 = vpop.f32.mrb[0].mxu0
        %v1121 = vadd.f32 %v493, %v1120
        %v1122 = vpop.f32.mrb[0].mxu0
        %v1123 = vpop.f32.mrb[0].mxu0
        %v1124 = vadd.f32 %v493, %v1123
        %v1125 = vpop.f32.mrb[0].mxu0
        %1126 = vmatprep.mubr.bf16.mxu0 0
        %1127 = vmatmul.mubr.bf16.gmra.mrb[0].mxu0 %v836
        %v1128 = vpop.f32.mrb[0].mxu0
        %v1129 = vadd.f32 %v493, %v1128
        %v1130 = vpop.f32.mrb[0].mxu0
        %v1131 = vpop.f32.mrb[0].mxu0
        %v1132 = vadd.f32 %v493, %v1131
        %v1133 = vpop.f32.mrb[0].mxu0
        %1134 = vmatprep.mubr.bf16.mxu0 0
        %1135 = vmatmul.mubr.bf16.gmra.mrb[0].mxu0 %v839
        %v1136 = vpop.f32.mrb[0].mxu0
        %v1137 = vadd.f32 %v493, %v1136
        %v1138 = vpop.f32.mrb[0].mxu0
        %v1139 = vpop.f32.mrb[0].mxu0
        %v1140 = vadd.f32 %v493, %v1139
        %v1141 = vpop.f32.mrb[0].mxu0
        %1142 = vmatprep.mubr.bf16.mxu0 0
        %1143 = vmatmul.mubr.bf16.gmra.mrb[0].mxu0 %v842
        %v1144 = vpop.f32.mrb[0].mxu0
        %v1145 = vadd.f32 %v493, %v1144
        %v1146 = vpop.f32.mrb[0].mxu0
        %v1147 = vpop.f32.mrb[0].mxu0
        %v1148 = vadd.f32 %v493, %v1147
        %v1149 = vpop.f32.mrb[0].mxu0
        %1150 = vmatprep.mubr.bf16.mxu0 0
        %1151 = vmatmul.mubr.bf16.gmra.mrb[0].mxu0 %v845
        %v1152 = vpop.f32.mrb[0].mxu0
        %v1153 = vadd.f32 %v493, %v1152
        %v1154 = vpop.f32.mrb[0].mxu0
        %v1155 = vpop.f32.mrb[0].mxu0
        %v1156 = vadd.f32 %v493, %v1155
        %v1157 = vpop.f32.mrb[0].mxu0
        %1158 = vmatprep.mubr.bf16.mxu0 0
        %1159 = vmatmul.mubr.bf16.gmra.mrb[0].mxu0 %v848
        %v1160 = vpop.f32.mrb[0].mxu0
        %v1161 = vadd.f32 %v493, %v1160
        %v1162 = vpop.f32.mrb[0].mxu0
        %v1163 = vpop.f32.mrb[0].mxu0
        %v1164 = vadd.f32 %v493, %v1163
        %v1165 = vpop.f32.mrb[0].mxu0
        %1166 = vmatprep.mubr.bf16.mxu0 0
        %1167 = vmatmul.mubr.bf16.gmra.mrb[0].mxu0 %v851
        %v1168 = vpop.f32.mrb[0].mxu0
        %v1169 = vadd.f32 %v493, %v1168
        %v1170 = vpop.f32.mrb[0].mxu0
        %v1171 = vpop.f32.mrb[0].mxu0
        %v1172 = vadd.f32 %v493, %v1171
        %v1173 = vpop.f32.mrb[0].mxu0
        %1174 = vmatprep.mubr.bf16.mxu0 0
        %1175 = vmatmul.mubr.bf16.gmra.mrb[0].mxu0 %v854
        %v1176 = vpop.f32.mrb[0].mxu0
        %v1177 = vadd.f32 %v493, %v1176
        %v1178 = vpop.f32.mrb[0].mxu0
        %v1179 = vpop.f32.mrb[0].mxu0
        %v1180 = vadd.f32 %v493, %v1179
        %v1181 = vpop.f32.mrb[0].mxu0
        %1182 = vmatprep.mubr.bf16.mxu0 0
        %1183 = vmatmul.mubr.bf16.gmra.mrb[0].mxu0 %v857
        %v1184 = vpop.f32.mrb[0].mxu0
        %v1185 = vadd.f32 %v493, %v1184
        %v1186 = vpop.f32.mrb[0].mxu0
        %v1187 = vpop.f32.mrb[0].mxu0
        %v1188 = vadd.f32 %v493, %v1187
        %v1189 = vpop.f32.mrb[0].mxu0
        %1190 = vmatprep.mubr.bf16.mxu0 0
        %1191 = vmatmul.mubr.bf16.gmra.mrb[0].mxu0 %v860
        %v1192 = vpop.f32.mrb[0].mxu0
        %v1193 = vadd.f32 %v493, %v1192
        %v1194 = vpop.f32.mrb[0].mxu0
        %v1195 = vpop.f32.mrb[0].mxu0
        %v1196 = vadd.f32 %v493, %v1195
        %v1197 = vpop.f32.mrb[0].mxu0
        %1198 = vmatprep.mubr.bf16.mxu0 0
        %1199 = vmatmul.mubr.bf16.gmra.mrb[0].mxu0 %v863
        %v1200 = vpop.f32.mrb[0].mxu0
        %v1201 = vadd.f32 %v493, %v1200
        %v1202 = vpop.f32.mrb[0].mxu0
        %v1203 = vpop.f32.mrb[0].mxu0
        %v1204 = vadd.f32 %v493, %v1203
        %v1205 = vpop.f32.mrb[0].mxu0
        %1206 = vmatprep.mubr.bf16.mxu0 0
        %1207 = vmatmul.mubr.bf16.gmra.mrb[0].mxu0 %v866
        %v1208 = vpop.f32.mrb[0].mxu0
        %v1209 = vadd.f32 %v493, %v1208
        %v1210 = vpop.f32.mrb[0].mxu0
        %v1211 = vpop.f32.mrb[0].mxu0
        %v1212 = vadd.f32 %v493, %v1211
        %v1213 = vpop.f32.mrb[0].mxu0
        %1214 = vmatprep.mubr.bf16.mxu0 0
        %1215 = vmatmul.mubr.bf16.gmra.mrb[0].mxu0 %v869
        %v1216 = vpop.f32.mrb[0].mxu0
        %v1217 = vadd.f32 %v493, %v1216
        %v1218 = vpop.f32.mrb[0].mxu0
        %v1219 = vpop.f32.mrb[0].mxu0
        %v1220 = vadd.f32 %v493, %v1219
        %v1221 = vpop.f32.mrb[0].mxu0
        %1222 = vmatprep.mubr.bf16.mxu0 0
        %1223 = vmatmul.mubr.bf16.gmra.mrb[0].mxu0 %v872
        %v1224 = vpop.f32.mrb[0].mxu0
        %v1225 = vadd.f32 %v493, %v1224
        %v1226 = vpop.f32.mrb[0].mxu0
        %v1227 = vpop.f32.mrb[0].mxu0
        %v1228 = vadd.f32 %v493, %v1227
        %v1229 = vpop.f32.mrb[0].mxu0
        %1230 = vmatprep.mubr.bf16.mxu0 0
        %1231 = vmatmul.mubr.bf16.gmra.mrb[0].mxu0 %v875
        %v1232 = vpop.f32.mrb[0].mxu0
        %v1233 = vadd.f32 %v493, %v1232
        %v1234 = vpop.f32.mrb[0].mxu0
        %v1235 = vpop.f32.mrb[0].mxu0
        %v1236 = vadd.f32 %v493, %v1235
        %v1237 = vpop.f32.mrb[0].mxu0
        %1238 = vmatprep.mubr.bf16.mxu0 0
        %1239 = vmatmul.mubr.bf16.gmra.mrb[0].mxu0 %v878
        %v1240 = vpop.f32.mrb[0].mxu0
        %v1241 = vadd.f32 %v493, %v1240
        %v1242 = vpop.f32.mrb[0].mxu0
        %v1243 = vpop.f32.mrb[0].mxu0
        %v1244 = vadd.f32 %v493, %v1243
        %v1245 = vpop.f32.mrb[0].mxu0
        %1246 = vmatprep.mubr.bf16.mxu0 0
        %1247 = vmatmul.mubr.bf16.gmra.mrb[0].mxu0 %v881
        %v1248 = vpop.f32.mrb[0].mxu0
        %v1249 = vadd.f32 %v493, %v1248
        %v1250 = vpop.f32.mrb[0].mxu0
        %v1251 = vpop.f32.mrb[0].mxu0
        %v1252 = vadd.f32 %v493, %v1251
        %v1253 = vpop.f32.mrb[0].mxu0
        %1254 = vmatprep.mubr.bf16.mxu0 0
        %1255 = vmatmul.mubr.bf16.gmra.mrb[0].mxu0 %v884
        %v1256 = vpop.f32.mrb[0].mxu0
        %v1257 = vadd.f32 %v493, %v1256
        %v1258 = vpop.f32.mrb[0].mxu0
        %v1259 = vpop.f32.mrb[0].mxu0
        %v1260 = vadd.f32 %v493, %v1259
        %v1261 = vpop.f32.mrb[0].mxu0
        %1262 = vmatprep.mubr.bf16.mxu0 0
        %1263 = vmatmul.mubr.bf16.gmra.mrb[0].mxu0 %v887
        %v1264 = vpop.f32.mrb[0].mxu0
        %v1265 = vadd.f32 %v493, %v1264
        %v1266 = vpop.f32.mrb[0].mxu0
        %v1267 = vpop.f32.mrb[0].mxu0
        %v1268 = vadd.f32 %v493, %v1267
        %v1269 = vpop.f32.mrb[0].mxu0
        %1270 = vmatprep.mubr.bf16.mxu0 0
        %1271 = vmatmul.mubr.bf16.gmra.mrb[0].mxu0 %v890
        %v1272 = vpop.f32.mrb[0].mxu0
        %v1273 = vadd.f32 %v493, %v1272
        %v1274 = vpop.f32.mrb[0].mxu0
        %v1275 = vpop.f32.mrb[0].mxu0
        %v1276 = vadd.f32 %v493, %v1275
        %v1277 = vpop.f32.mrb[0].mxu0
        %1278 = vmatprep.mubr.bf16.mxu0 0
        %1279 = vmatmul.mubr.bf16.gmra.mrb[0].mxu0 %v893
        %v1280 = vpop.f32.mrb[0].mxu0
        %v1281 = vadd.f32 %v493, %v1280
        %v1282 = vpop.f32.mrb[0].mxu0
        %v1283 = vpop.f32.mrb[0].mxu0
        %v1284 = vadd.f32 %v493, %v1283
        %v1285 = vpop.f32.mrb[0].mxu0
        %1286 = vmatprep.mubr.bf16.mxu0 0
        %1287 = vmatmul.mubr.bf16.gmra.mrb[0].mxu0 %v896
        %v1288 = vpop.f32.mrb[0].mxu0
        %v1289 = vadd.f32 %v493, %v1288
        %v1290 = vpop.f32.mrb[0].mxu0
        %v1291 = vpop.f32.mrb[0].mxu0
        %v1292 = vadd.f32 %v493, %v1291
        %v1293 = vpop.f32.mrb[0].mxu0
        %1294 = vmatprep.mubr.bf16.mxu0 0
        %1295 = vmatmul.mubr.bf16.gmra.mrb[0].mxu0 %v899
        %v1296 = vpop.f32.mrb[0].mxu0
        %v1297 = vadd.f32 %v493, %v1296
        %v1298 = vpop.f32.mrb[0].mxu0
        %v1299 = vpop.f32.mrb[0].mxu0
        %v1300 = vadd.f32 %v493, %v1299
        %v1301 = vpop.f32.mrb[0].mxu0
        %1302 = vmatprep.mubr.bf16.mxu0 0
        %1303 = vmatmul.mubr.bf16.gmra.mrb[0].mxu0 %v902
        %v1304 = vpop.f32.mrb[0].mxu0
        %v1305 = vadd.f32 %v493, %v1304
        %v1306 = vpop.f32.mrb[0].mxu0
        %v1307 = vpop.f32.mrb[0].mxu0
        %v1308 = vadd.f32 %v493, %v1307
        %v1309 = vpop.f32.mrb[0].mxu0
        %1310 = vmatprep.mubr.bf16.mxu0 0
        %1311 = vmatmul.mubr.bf16.gmra.mrb[0].mxu0 %v905
        %v1312 = vpop.f32.mrb[0].mxu0
        %v1313 = vadd.f32 %v493, %v1312
        %v1314 = vpop.f32.mrb[0].mxu0
        %v1315 = vpop.f32.mrb[0].mxu0
        %v1316 = vadd.f32 %v493, %v1315
        %v1317 = vpop.f32.mrb[0].mxu0
        %1318 = vmatprep.mubr.bf16.mxu0 0
        %1319 = vmatmul.mubr.bf16.gmra.mrb[0].mxu0 %v908
        %v1320 = vpop.f32.mrb[0].mxu0
        %v1321 = vadd.f32 %v493, %v1320
        %v1322 = vpop.f32.mrb[0].mxu0
        %v1323 = vpop.f32.mrb[0].mxu0
        %v1324 = vadd.f32 %v493, %v1323
        %v1325 = vpop.f32.mrb[0].mxu0
        %1326 = vdwg.mxu0
        %v1327 = vmax.f32 %v945, 0.0
        %v1328 = vmax.f32 %v948, 0.0
        %v1329 = vmax.f32 %v953, 0.0
        %v1330 = vmax.f32 %v956, 0.0
        %v1331 = vmax.f32 %v961, 0.0
        %v1332 = vmax.f32 %v964, 0.0
        %v1333 = vmax.f32 %v969, 0.0
        %v1334 = vmax.f32 %v972, 0.0
        %v1335 = vmax.f32 %v977, 0.0
        %v1336 = vmax.f32 %v980, 0.0
        %v1337 = vmax.f32 %v985, 0.0
        %v1338 = vmax.f32 %v988, 0.0
        %v1339 = vmax.f32 %v993, 0.0
        %v1340 = vmax.f32 %v996, 0.0
        %v1341 = vmax.f32 %v1001, 0.0
        %v1342 = vmax.f32 %v1004, 0.0
        %v1343 = vmax.f32 %v1009, 0.0
        %v1344 = vmax.f32 %v1012, 0.0
        %v1345 = vmax.f32 %v1017, 0.0
        %v1346 = vmax.f32 %v1020, 0.0
        %v1347 = vmax.f32 %v1025, 0.0
        %v1348 = vmax.f32 %v1028, 0.0
        %v1349 = vmax.f32 %v1033, 0.0
        %v1350 = vmax.f32 %v1036, 0.0
        %v1351 = vmax.f32 %v1041, 0.0
        %v1352 = vmax.f32 %v1044, 0.0
        %v1353 = vmax.f32 %v1049, 0.0
        %v1354 = vmax.f32 %v1052, 0.0
        %v1355 = vmax.f32 %v1057, 0.0
        %v1356 = vmax.f32 %v1060, 0.0
        %v1357 = vmax.f32 %v1065, 0.0
        %v1358 = vmax.f32 %v1068, 0.0
        %v1359 = vmax.f32 %v1073, 0.0
        %v1360 = vmax.f32 %v1076, 0.0
        %v1361 = vmax.f32 %v1081, 0.0
        %v1362 = vmax.f32 %v1084, 0.0
        %v1363 = vmax.f32 %v1089, 0.0
        %v1364 = vmax.f32 %v1092, 0.0
        %v1365 = vmax.f32 %v1097, 0.0
        %v1366 = vmax.f32 %v1100, 0.0
        %v1367 = vmax.f32 %v1105, 0.0
        %v1368 = vmax.f32 %v1108, 0.0
        %v1369 = vmax.f32 %v1113, 0.0
        %v1370 = vmax.f32 %v1116, 0.0
        %v1371 = vmax.f32 %v1121, 0.0
        %v1372 = vmax.f32 %v1124, 0.0
        %v1373 = vmax.f32 %v1129, 0.0
        %v1374 = vmax.f32 %v1132, 0.0
        %v1375 = vmax.f32 %v1137, 0.0
        %v1376 = vmax.f32 %v1140, 0.0
        %v1377 = vmax.f32 %v1145, 0.0
        %v1378 = vmax.f32 %v1148, 0.0
        %v1379 = vmax.f32 %v1153, 0.0
        %v1380 = vmax.f32 %v1156, 0.0
        %v1381 = vmax.f32 %v1161, 0.0
        %v1382 = vmax.f32 %v1164, 0.0
        %v1383 = vmax.f32 %v1169, 0.0
        %v1384 = vmax.f32 %v1172, 0.0
        %v1385 = vmax.f32 %v1177, 0.0
        %v1386 = vmax.f32 %v1180, 0.0
        %v1387 = vmax.f32 %v1185, 0.0
        %v1388 = vmax.f32 %v1188, 0.0
        %v1389 = vmax.f32 %v1193, 0.0
        %v1390 = vmax.f32 %v1196, 0.0
        %v1391 = vmax.f32 %v1201, 0.0
        %v1392 = vmax.f32 %v1204, 0.0
        %v1393 = vmax.f32 %v1209, 0.0
        %v1394 = vmax.f32 %v1212, 0.0
        %v1395 = vmax.f32 %v1217, 0.0
        %v1396 = vmax.f32 %v1220, 0.0
        %v1397 = vmax.f32 %v1225, 0.0
        %v1398 = vmax.f32 %v1228, 0.0
        %v1399 = vmax.f32 %v1233, 0.0
        %v1400 = vmax.f32 %v1236, 0.0
        %v1401 = vmax.f32 %v1241, 0.0
        %v1402 = vmax.f32 %v1244, 0.0
        %v1403 = vmax.f32 %v1249, 0.0
        %v1404 = vmax.f32 %v1252, 0.0
        %v1405 = vmax.f32 %v1257, 0.0
        %v1406 = vmax.f32 %v1260, 0.0
        %v1407 = vmax.f32 %v1265, 0.0
        %v1408 = vmax.f32 %v1268, 0.0
        %v1409 = vmax.f32 %v1273, 0.0
        %v1410 = vmax.f32 %v1276, 0.0
        %v1411 = vmax.f32 %v1281, 0.0
        %v1412 = vmax.f32 %v1284, 0.0
        %v1413 = vmax.f32 %v1289, 0.0
        %v1414 = vmax.f32 %v1292, 0.0
        %v1415 = vmax.f32 %v1297, 0.0
        %v1416 = vmax.f32 %v1300, 0.0
        %v1417 = vmax.f32 %v1305, 0.0
        %v1418 = vmax.f32 %v1308, 0.0
        %v1419 = vmax.f32 %v1313, 0.0
        %v1420 = vmax.f32 %v1316, 0.0
        %v1421 = vmax.f32 %v1321, 0.0
        %v1422 = vmax.f32 %v1324, 0.0
        %v1423 = vmax.f32 %v1327, %v1339
        %v1424 = vmax.f32 %v1328, %v1340
        %v1425 = vmax.f32 %v1329, %v1341
        %v1426 = vmax.f32 %v1330, %v1342
        %v1427 = vmax.f32 %v1331, %v1343
        %v1428 = vmax.f32 %v1332, %v1344
        %v1429 = vmax.f32 %v1333, %v1345
        %v1430 = vmax.f32 %v1334, %v1346
        %v1431 = vmax.f32 %v1335, %v1347
        %v1432 = vmax.f32 %v1336, %v1348
        %v1433 = vmax.f32 %v1337, %v1349
        %v1434 = vmax.f32 %v1338, %v1350
        %v1435 = vmax.f32 %v1375, %v1387
        %v1436 = vmax.f32 %v1376, %v1388
        %v1437 = vmax.f32 %v1377, %v1389
        %v1438 = vmax.f32 %v1378, %v1390
        %v1439 = vmax.f32 %v1379, %v1391
        %v1440 = vmax.f32 %v1380, %v1392
        %v1441 = vmax.f32 %v1381, %v1393
        %v1442 = vmax.f32 %v1382, %v1394
        %v1443 = vmax.f32 %v1383, %v1395
        %v1444 = vmax.f32 %v1384, %v1396
        %v1445 = vmax.f32 %v1385, %v1397
        %v1446 = vmax.f32 %v1386, %v1398
        %v1447 = vmax.f32 %v1351, %v1363
        %v1448 = vmax.f32 %v1352, %v1364
        %v1449 = vmax.f32 %v1353, %v1365
        %v1450 = vmax.f32 %v1354, %v1366
        %v1451 = vmax.f32 %v1355, %v1367
        %v1452 = vmax.f32 %v1356, %v1368
        %v1453 = vmax.f32 %v1357, %v1369
        %v1454 = vmax.f32 %v1358, %v1370
        %v1455 = vmax.f32 %v1359, %v1371
        %v1456 = vmax.f32 %v1360, %v1372
        %v1457 = vmax.f32 %v1361, %v1373
        %v1458 = vmax.f32 %v1362, %v1374
        %v1459 = vmax.f32 %v1399, %v1411
        %v1460 = vmax.f32 %v1400, %v1412
        %v1461 = vmax.f32 %v1401, %v1413
        %v1462 = vmax.f32 %v1402, %v1414
        %v1463 = vmax.f32 %v1403, %v1415
        %v1464 = vmax.f32 %v1404, %v1416
        %v1465 = vmax.f32 %v1405, %v1417
        %v1466 = vmax.f32 %v1406, %v1418
        %v1467 = vmax.f32 %v1407, %v1419
        %v1468 = vmax.f32 %v1408, %v1420
        %v1469 = vmax.f32 %v1409, %v1421
        %v1470 = vmax.f32 %v1410, %v1422
        %v1471 = vmax.f32 %v1423, %v1447
        %v1472 = vmax.f32 %v1424, %v1448
        %v1473 = vmax.f32 %v1425, %v1449
        %v1474 = vmax.f32 %v1426, %v1450
        %v1475 = vmax.f32 %v1427, %v1451
        %v1476 = vmax.f32 %v1428, %v1452
        %v1477 = vmax.f32 %v1429, %v1453
        %v1478 = vmax.f32 %v1430, %v1454
        %v1479 = vmax.f32 %v1431, %v1455
        %v1480 = vmax.f32 %v1432, %v1456
        %v1481 = vmax.f32 %v1433, %v1457
        %v1482 = vmax.f32 %v1434, %v1458
        %v1483 = vmax.f32 %v1435, %v1459
        %v1484 = vmax.f32 %v1436, %v1460
        %v1485 = vmax.f32 %v1437, %v1461
        %v1486 = vmax.f32 %v1438, %v1462
        %v1487 = vmax.f32 %v1439, %v1463
        %v1488 = vmax.f32 %v1440, %v1464
        %v1489 = vmax.f32 %v1441, %v1465
        %v1490 = vmax.f32 %v1442, %v1466
        %v1491 = vmax.f32 %v1443, %v1467
        %v1492 = vmax.f32 %v1444, %v1468
        %v1493 = vmax.f32 %v1445, %v1469
        %v1494 = vmax.f32 %v1446, %v1470
        %v1495 = vpack.c.bf16 %v1472, %v1471
        %v1496 = vpack.c.bf16 %v1474, %v1473
        %v1497 = vpack.c.bf16 %v1476, %v1475
        %v1498 = vpack.c.bf16 %v1478, %v1477
        %v1499 = vpack.c.bf16 %v1480, %v1479
        %v1500 = vpack.c.bf16 %v1482, %v1481
        %v1501 = vpack.c.bf16 %v1484, %v1483
        %v1502 = vpack.c.bf16 %v1486, %v1485
        %v1503 = vpack.c.bf16 %v1488, %v1487
        %v1504 = vpack.c.bf16 %v1490, %v1489
        %v1505 = vpack.c.bf16 %v1492, %v1491
        %v1506 = vpack.c.bf16 %v1494, %v1493
        %v1507 = vlaneseq
        %v1508 = vshrl.u32 %v1507, 7
        %vm1509 = vcmp.lt.s32.totalorder %v1508, 0
        %v1510 = vsub.s32 0, %v1508
        %v1511 = vsel %vm1509, %v1510, %v1508
        %v1512 = vmul.u32.u64.compose %v1511, 2863311531
        %v1513 = vextract.low.u32 %v1512
        %v1514 = vextract.high.u32 %v1512
        %v1515 = vshrl.u32 %v1514, 1
        %v1516 = vmul.u32 %v1515, 3
        %v1517 = vsub.s32 %v1511, %v1516
        %v1518 = vsub.s32 0, %v1517
        %v1519 = vsel %vm1509, %v1518, %v1517
        %vm1520 = vcmp.ne.s32.totalorder %v1519, 0
        %vm1521 = vcmp.lt.s32.totalorder %v1519, 0
        %vm1522 = vmand %vm1521, %vm1520
        %v1523 = vadd.s32 %v1519, 3
        %v1524 = vsel %vm1522, %v1523, %v1519
        %vm1525 = vcmp.ne.s32.totalorder %v1524, 0
        %v1526 = vsel %vm1525, 1, 0
        %v1527 = vcvt.s32.f32 %v1526
        %v1528 = vpack.c.bf16 %v1527, %v1527
        %vm1529 = vsmask.f32 1280
        %v1531 = vshrl.u32 %v1499, 16
        %v1533 = vrot.slane %v1531, 6
        %v1534 = vshll.u32 %v1499, 16
        %v1536 = vrot.slane %v1534, 7
        %v1537 = vor.u32 %v1533, %v1536
        %v1539 = vshrl.u32 %v1500, 16
        %v1541 = vrot.slane %v1539, 6
        %v1542 = vshll.u32 %v1500, 16
        %v1544 = vrot.slane %v1542, 7
        %v1545 = vor.u32 %v1541, %v1544
        %v1546 = vsel %vm1529, %v1537, %v1545
        %v1548 = vshrl.u32 %v1505, 16
        %v1550 = vrot.slane %v1548, 6
        %v1551 = vshll.u32 %v1505, 16
        %v1553 = vrot.slane %v1551, 7
        %v1554 = vor.u32 %v1550, %v1553
        %v1556 = vshrl.u32 %v1506, 16
        %v1558 = vrot.slane %v1556, 6
        %v1559 = vshll.u32 %v1506, 16
        %v1561 = vrot.slane %v1559, 7
        %v1562 = vor.u32 %v1558, %v1561
        %v1563 = vsel %vm1529, %v1554, %v1562
        %vm1566 = vcmask 1040384
        %vm1567 = vsmask.f32 256
        %vm1568 = vmand %vm1566, %vm1567
        %v1569 = vsel %vm1568, 0, %v1546
        %v1570 = vsel %vm1568, 0, %v1563
        %v1571 = vmul.bf16 %v1569, %v1528
        %v1572 = vmul.bf16 %v1570, %v1528
        %v1573 = vrot.slane %v1539, 4
        %v1574 = vrot.slane %v1542, 5
        %v1575 = vor.u32 %v1573, %v1574
        %v1576 = vrot.slane %v1556, 4
        %v1577 = vrot.slane %v1559, 5
        %v1578 = vor.u32 %v1576, %v1577
        %v1581 = vsel %vm1568, 0, %v1575
        %v1582 = vsel %vm1568, 0, %v1578
        %v1583 = vmul.bf16 %v1581, %v1528
        %v1584 = vmul.bf16 %v1582, %v1528
        %v1587 = vrot.slane %v1499, 1
        %v1588 = vrot.slane %v1505, 1
        %v1591 = vrot.slane %v1583, 2
        %v1592 = vrot.slane %v1584, 2
        %v1595 = vrot.slane %v1500, 1
        %v1596 = vrot.slane %v1506, 1
        %vm1597 = vcmask 1042432
        %v1600 = vsel %vm1597, %v1571, %v1587
        %v1603 = vsel %vm1597, %v1572, %v1588
        %vm1604 = vcmask 1045504
        %v1606 = vsel %vm1604, %v1600, %v1591
        %v1608 = vsel %vm1604, %v1603, %v1592
        %vm1609 = vcmask 1040384
        %v1611 = vsel %vm1609, %v1591, %v1595
        %v1613 = vsel %vm1609, %v1592, %v1596
        %v1614 = vshrl.u32 %v1606, 16
        %v1616 = vrot.slane %v1614, 4
        %v1617 = vshll.u32 %v1606, 16
        %v1619 = vrot.slane %v1617, 5
        %v1620 = vor.u32 %v1616, %v1619
        %v1621 = vshrl.u32 %v1608, 16
        %v1623 = vrot.slane %v1621, 4
        %v1624 = vshll.u32 %v1608, 16
        %v1626 = vrot.slane %v1624, 5
        %v1627 = vor.u32 %v1623, %v1626
        %vm1630 = vcmask 1041408
        %vm1631 = vmand %vm1630, %vm1529
        %v1632 = vsel %vm1631, 0, %v1620
        %v1633 = vsel %vm1631, 0, %v1627
        %v1634 = vshrl.u32 %v1611, 16
        %v1636 = vrot.slane %v1634, 7
        %v1637 = vshll.u32 %v1611, 16
        %v1639 = vor.u32 %v1636, %v1637
        %v1640 = vshrl.u32 %v1613, 16
        %v1642 = vrot.slane %v1640, 7
        %v1643 = vshll.u32 %v1613, 16
        %v1645 = vor.u32 %v1642, %v1643
        %v1648 = vsel %vm1631, 0, %v1639
        %v1649 = vsel %vm1631, 0, %v1645
        %v1652 = vrot.slane %v1648, 5
        %v1653 = vrot.slane %v1649, 5
        %v1656 = vrot.slane %v1606, 2
        %v1657 = vrot.slane %v1608, 2
        %v1660 = vsel %vm1597, %v1632, %v1652
        %v1663 = vsel %vm1597, %v1633, %v1653
        %v1665 = vsel %vm1604, %v1660, %v1656
        %v1667 = vsel %vm1604, %v1663, %v1657
        %v1669 = vshrl.u32 %v1498, 16
        %v1671 = vrot.slane %v1669, 4
        %v1672 = vshll.u32 %v1498, 16
        %v1674 = vrot.slane %v1672, 5
        %v1675 = vor.u32 %v1671, %v1674
        %v1677 = vshrl.u32 %v1504, 16
        %v1679 = vrot.slane %v1677, 4
        %v1680 = vshll.u32 %v1504, 16
        %v1682 = vrot.slane %v1680, 5
        %v1683 = vor.u32 %v1679, %v1682
        %v1686 = vsel %vm1631, 0, %v1675
        %v1687 = vsel %vm1631, 0, %v1683
        %v1688 = vrot.slane %v1531, 7
        %v1689 = vor.u32 %v1688, %v1534
        %v1690 = vrot.slane %v1548, 7
        %v1691 = vor.u32 %v1690, %v1551
        %v1694 = vsel %vm1631, 0, %v1689
        %v1695 = vsel %vm1631, 0, %v1691
        %v1698 = vrot.slane %v1694, 5
        %v1699 = vrot.slane %v1695, 5
        %v1702 = vrot.slane %v1498, 2
        %v1703 = vrot.slane %v1504, 2
        %v1706 = vsel %vm1597, %v1686, %v1698
        %v1709 = vsel %vm1597, %v1687, %v1699
        %v1711 = vsel %vm1604, %v1706, %v1702
        %v1713 = vsel %vm1604, %v1709, %v1703
        %v1714 = vrot.slane %v1542, 1
        %v1715 = vor.u32 %v1539, %v1714
        %v1716 = vrot.slane %v1559, 1
        %v1717 = vor.u32 %v1556, %v1716
        %v1720 = vsel %vm1631, 0, %v1715
        %v1721 = vsel %vm1631, 0, %v1717
        %v1722 = vrot.slane %v1539, 3
        %v1723 = vrot.slane %v1542, 4
        %v1724 = vor.u32 %v1722, %v1723
        %v1725 = vrot.slane %v1556, 3
        %v1726 = vrot.slane %v1559, 4
        %v1727 = vor.u32 %v1725, %v1726
        %v1730 = vsel %vm1631, 0, %v1724
        %v1731 = vsel %vm1631, 0, %v1727
        %v1734 = vrot.slane %v1730, 5
        %v1735 = vrot.slane %v1731, 5
        %v1736 = vrot.slane %v1499, 6
        %v1737 = vrot.slane %v1505, 6
        %v1738 = vrot.slane %v1500, 6
        %v1739 = vsel %vm1630, %v1736, %v1738
        %v1740 = vrot.slane %v1506, 6
        %v1741 = vsel %vm1630, %v1737, %v1740
        %v1744 = vsel %vm1597, %v1720, %v1734
        %v1747 = vsel %vm1597, %v1721, %v1735
        %v1749 = vsel %vm1604, %v1744, %v1736
        %v1751 = vsel %vm1604, %v1747, %v1737
        %v1753 = vsel %vm1609, %v1736, %v1739
        %v1755 = vsel %vm1609, %v1737, %v1741
        %v1757 = vshrl.u32 %v1496, 16
        %v1759 = vrot.slane %v1757, 6
        %v1760 = vshll.u32 %v1496, 16
        %v1762 = vrot.slane %v1760, 7
        %v1763 = vor.u32 %v1759, %v1762
        %v1765 = vshrl.u32 %v1497, 16
        %v1767 = vrot.slane %v1765, 6
        %v1768 = vshll.u32 %v1497, 16
        %v1770 = vrot.slane %v1768, 7
        %v1771 = vor.u32 %v1767, %v1770
        %v1772 = vsel %vm1529, %v1763, %v1771
        %v1774 = vshrl.u32 %v1502, 16
        %v1776 = vrot.slane %v1774, 6
        %v1777 = vshll.u32 %v1502, 16
        %v1779 = vrot.slane %v1777, 7
        %v1780 = vor.u32 %v1776, %v1779
        %v1782 = vshrl.u32 %v1503, 16
        %v1784 = vrot.slane %v1782, 6
        %v1785 = vshll.u32 %v1503, 16
        %v1787 = vrot.slane %v1785, 7
        %v1788 = vor.u32 %v1784, %v1787
        %v1789 = vsel %vm1529, %v1780, %v1788
        %v1792 = vsel %vm1568, 0, %v1772
        %v1793 = vsel %vm1568, 0, %v1789
        %v1794 = vmul.bf16 %v1792, %v1528
        %v1795 = vmul.bf16 %v1793, %v1528
        %v1796 = vrot.slane %v1765, 4
        %v1797 = vrot.slane %v1768, 5
        %v1798 = vor.u32 %v1796, %v1797
        %v1799 = vrot.slane %v1782, 4
        %v1800 = vrot.slane %v1785, 5
        %v1801 = vor.u32 %v1799, %v1800
        %v1804 = vsel %vm1568, 0, %v1798
        %v1805 = vsel %vm1568, 0, %v1801
        %v1806 = vmul.bf16 %v1804, %v1528
        %v1807 = vmul.bf16 %v1805, %v1528
        %v1810 = vrot.slane %v1496, 1
        %v1811 = vrot.slane %v1502, 1
        %v1814 = vrot.slane %v1806, 2
        %v1815 = vrot.slane %v1807, 2
        %v1818 = vrot.slane %v1497, 1
        %v1819 = vrot.slane %v1503, 1
        %v1822 = vsel %vm1597, %v1794, %v1810
        %v1825 = vsel %vm1597, %v1795, %v1811
        %v1827 = vsel %vm1604, %v1822, %v1814
        %v1829 = vsel %vm1604, %v1825, %v1815
        %v1831 = vsel %vm1609, %v1814, %v1818
        %v1833 = vsel %vm1609, %v1815, %v1819
        %1838 = vrot.lane.b32.xlu0 %v1711, 16
        %v1839 = vpop.permute.xlu0 %1838
        %1840 = vrot.lane.b32.xlu0 %v1702, 16
        %v1841 = vpop.permute.xlu0 %1840
        %1842 = vrot.lane.b32.xlu0 %v1713, 16
        %v1843 = vpop.permute.xlu0 %1842
        %1844 = vrot.lane.b32.xlu0 %v1703, 16
        %v1845 = vpop.permute.xlu0 %1844
        %1850 = vrot.lane.b32.xlu0 %v1749, 32
        %v1851 = vpop.permute.xlu0 %1850
        %1852 = vrot.lane.b32.xlu0 %v1753, 32
        %v1853 = vpop.permute.xlu0 %1852
        %1854 = vrot.lane.b32.xlu0 %v1751, 32
        %v1855 = vpop.permute.xlu0 %1854
        %1856 = vrot.lane.b32.xlu0 %v1755, 32
        %v1857 = vpop.permute.xlu0 %1856
        %1862 = vrot.lane.b32.xlu0 %v1827, 48
        %v1863 = vpop.permute.xlu0 %1862
        %1864 = vrot.lane.b32.xlu0 %v1831, 48
        %v1865 = vpop.permute.xlu0 %1864
        %1866 = vrot.lane.b32.xlu0 %v1829, 48
        %v1867 = vpop.permute.xlu0 %1866
        %1868 = vrot.lane.b32.xlu0 %v1833, 48
        %v1869 = vpop.permute.xlu0 %1868
        %1872 = vrot.lane.b32.xlu0 %v1495, 64
        %v1873 = vpop.permute.xlu0 %1872
        %1874 = vrot.lane.b32.xlu0 %v1496, 64
        %v1875 = vpop.permute.xlu0 %1874
        %1876 = vrot.lane.b32.xlu0 %v1501, 64
        %v1877 = vpop.permute.xlu0 %1876
        %1878 = vrot.lane.b32.xlu0 %v1502, 64
        %v1879 = vpop.permute.xlu0 %1878
        %vm1880 = vcmask 1043456
        %v1881 = vrot.slane %v1496, 4
        %v1882 = vrot.slane %v1497, 4
        %v1883 = vsel %vm1880, %v1881, %v1882
        %v1884 = vrot.slane %v1502, 4
        %v1885 = vrot.slane %v1503, 4
        %v1886 = vsel %vm1880, %v1884, %v1885
        %1887 = vrot.lane.b32.xlu0 %v1883, 80
        %v1888 = vpop.permute.xlu0 %1887
        %1889 = vrot.lane.b32.xlu0 %v1882, 80
        %v1890 = vpop.permute.xlu0 %1889
        %1891 = vrot.lane.b32.xlu0 %v1886, 80
        %v1892 = vpop.permute.xlu0 %1891
        %1893 = vrot.lane.b32.xlu0 %v1885, 80
        %v1894 = vpop.permute.xlu0 %1893
        %1897 = vrot.lane.b32.xlu0 %v1606, 96
        %v1898 = vpop.permute.xlu0 %1897
        %1899 = vrot.lane.b32.xlu0 %v1611, 96
        %v1900 = vpop.permute.xlu0 %1899
        %1901 = vrot.lane.b32.xlu0 %v1608, 96
        %v1902 = vpop.permute.xlu0 %1901
        %1903 = vrot.lane.b32.xlu0 %v1613, 96
        %v1904 = vpop.permute.xlu0 %1903
        %1905 = vrot.lane.b32.xlu0 %v1498, 112
        %v1906 = vpop.permute.xlu0 %1905
        %1907 = vrot.lane.b32.xlu0 %v1499, 112
        %v1908 = vpop.permute.xlu0 %1907
        %1909 = vrot.lane.b32.xlu0 %v1504, 112
        %v1910 = vpop.permute.xlu0 %1909
        %1911 = vrot.lane.b32.xlu0 %v1505, 112
        %v1912 = vpop.permute.xlu0 %1911
        %v1913 = vrot.slane %v1499, 4
        %v1914 = vrot.slane %v1500, 4
        %v1915 = vsel %vm1880, %v1913, %v1914
        %v1916 = vrot.slane %v1505, 4
        %v1917 = vrot.slane %v1506, 4
        %v1918 = vsel %vm1880, %v1916, %v1917
        %vm1919 = vcmask 130048
        %v1921 = vsel %vm1919, %v1665, %v1839
        %v1923 = vsel %vm1919, %v1656, %v1841
        %v1925 = vsel %vm1919, %v1667, %v1843
        %v1927 = vsel %vm1919, %v1657, %v1845
        %vm1928 = vcmask 261120
        %v1930 = vsel %vm1928, %v1921, %v1851
        %v1932 = vsel %vm1928, %v1923, %v1853
        %v1934 = vsel %vm1928, %v1925, %v1855
        %v1936 = vsel %vm1928, %v1927, %v1857
        %vm1937 = vcmask 392192
        %v1939 = vsel %vm1937, %v1930, %v1863
        %v1941 = vsel %vm1937, %v1932, %v1865
        %v1943 = vsel %vm1937, %v1934, %v1867
        %v1945 = vsel %vm1937, %v1936, %v1869
        %vm1946 = vcmask 523264
        %v1948 = vsel %vm1946, %v1939, %v1873
        %v1950 = vsel %vm1946, %v1941, %v1875
        %v1952 = vsel %vm1946, %v1943, %v1877
        %v1954 = vsel %vm1946, %v1945, %v1879
        %v1956 = vsel %vm765, %v1948, %v1888
        %v1958 = vsel %vm765, %v1950, %v1890
        %v1960 = vsel %vm765, %v1952, %v1892
        %v1962 = vsel %vm765, %v1954, %v1894
        %vm1963 = vcmask 785408
        %v1965 = vsel %vm1963, %v1956, %v1898
        %v1967 = vsel %vm1963, %v1958, %v1900
        %v1969 = vsel %vm1963, %v1960, %v1902
        %v1971 = vsel %vm1963, %v1962, %v1904
        %vm1972 = vcmask 916480
        %v1974 = vsel %vm1972, %v1965, %v1906
        %v1976 = vsel %vm1972, %v1967, %v1908
        %v1978 = vsel %vm1972, %v1969, %v1910
        %v1980 = vsel %vm1972, %v1971, %v1912
        %v1985 = vunpack.c.l.b16 %v1974
        %v1986 = vunpack.c.l.b16 %v1915
        %v1987 = vunpack.c.h.b16 %v1974
        %v1988 = vunpack.c.h.b16 %v1915
        %v1989 = vunpack.c.l.b16 %v1976
        %v1990 = vunpack.c.l.b16 %v1914
        %v1991 = vunpack.c.l.b16 %v1978
        %v1992 = vunpack.c.l.b16 %v1918
        %v1993 = vunpack.c.h.b16 %v1978
        %v1994 = vunpack.c.h.b16 %v1918
        %v1995 = vunpack.c.l.b16 %v1980
        %v1996 = vunpack.c.l.b16 %v1917
        %v1997 = vld [vmem:[#allocation8] sm:$0xf]
        %v1998 = vld [vmem:[#allocation8 + $0x4] sm:$0xf]
        %v1999 = vld [vmem:[#allocation8 + $0x8] sm:$0xf]
        %v2000 = vld [vmem:[#allocation8 + $0xc] sm:$0xf]
        %v2001 = vld [vmem:[#allocation8 + $0x10] sm:$0xf]
        %v2002 = vld [vmem:[#allocation8 + $0x14] sm:$0xf]
        %v2003 = vld [vmem:[#allocation8 + $0x18] sm:$0xf]
        %v2004 = vld [vmem:[#allocation8 + $0x1c] sm:$0xf]
        %v2005 = vld [vmem:[#allocation8 + $0x20] sm:$0xf]
        %v2006 = vld [vmem:[#allocation8 + $0x24] sm:$0xf]
        %v2007 = vld [vmem:[#allocation8 + $0x28] sm:$0xf]
        %v2008 = vld [vmem:[#allocation8 + $0x2c] sm:$0xf]
        %v2009 = vld [vmem:[#allocation8 + $0x30] sm:$0xf]
        %v2010 = vld [vmem:[#allocation8 + $0x34] sm:$0xf]
        %v2011 = vld [vmem:[#allocation8 + $0x38] sm:$0xf]
        %v2012 = vld [vmem:[#allocation8 + $0x3c] sm:$0xf]
        %v2013 = vld [vmem:[#allocation8 + $0x40] sm:$0xf]
        %v2014 = vld [vmem:[#allocation8 + $0x44] sm:$0xf]
        %v2015 = vld [vmem:[#allocation10] sm:$0x1]
        %v2017 = vlaneseq
        %v2018 = vshrl.u32 %v2017, 7
        %v2019 = vsub.s32 0, %v2018
        %v2020 = vrot.slane %v2015, %v2019
        %v2022 = vpack.c.b16 %v1987, %v1985
        %v2023 = vpack.c.b16 %v1988, %v1986
        %v2024 = vpack.c.b16 %v1991, %v1989
        %v2025 = vpack.c.b16 %v1992, %v1990
        %v2026 = vpack.c.b16 %v1995, %v1993
        %v2027 = vpack.c.b16 %v1996, %v1994
        %v2049 = vunpack.c.l.b16 %v1997
        %v2050 = vunpack.c.l.b16 %v1998
        %v2051 = vunpack.c.l.b16 %v1999
        %v2052 = vunpack.c.l.b16 %v2000
        %v2053 = vunpack.c.l.b16 %v2001
        %v2054 = vunpack.c.l.b16 %v2002
        %v2055 = vunpack.c.l.b16 %v2003
        %v2056 = vunpack.c.l.b16 %v2004
        %v2057 = vunpack.c.l.b16 %v2005
        %v2058 = vunpack.c.l.b16 %v2006
        %v2059 = vunpack.c.l.b16 %v2007
        %v2060 = vunpack.c.l.b16 %v2008
        %v2061 = vunpack.c.l.b16 %v2009
        %v2062 = vunpack.c.l.b16 %v2010
        %v2063 = vunpack.c.l.b16 %v2011
        %v2064 = vunpack.c.l.b16 %v2012
        %v2065 = vunpack.c.l.b16 %v2013
        %v2066 = vunpack.c.l.b16 %v2014
        %v2067 = vpack.c.b16 %v2050, %v2049
        %v2068 = vpack.c.b16 %v2052, %v2051
        %v2069 = vpack.c.b16 %v2054, %v2053
        %v2070 = vpack.c.b16 %v2056, %v2055
        %v2071 = vpack.c.b16 %v2058, %v2057
        %v2072 = vpack.c.b16 %v2060, %v2059
        %v2073 = vpack.c.b16 %v2062, %v2061
        %v2074 = vpack.c.b16 %v2064, %v2063
        %v2075 = vpack.c.b16 %v2066, %v2065
        %v2086 = vsel %vm1919, %v2023, 0
        %v2089 = vsel %vm1919, %v2025, 0
        %v2092 = vsel %vm1919, %v2027, 0
        %2094 = vmatprep.subr.bf16.mxu0 0
        %2095 = vmatpush1.bf16.msra.mxu0 %v2067
        %2096 = vmatprep.subr.bf16.mxu0 0
        %2097 = vmatpush1.bf16.msra.mxu0 %v2068
        %2098 = vmatprep.subr.bf16.mxu0 0
        %2099 = vmatpush1.bf16.msra.mxu0 %v2069
        %2100 = vmatprep.subr.bf16.mxu0 0
        %2101 = vmatpush1.bf16.msra.mxu0 %v2070
        %2102 = vmatprep.subr.bf16.mxu0 0
        %2103 = vmatpush1.bf16.msra.mxu0 %v2071
        %2104 = vmatprep.subr.bf16.mxu0 0
        %2105 = vmatpush1.bf16.msra.mxu0 %v2072
        %2106 = vmatprep.subr.bf16.mxu0 0
        %2107 = vmatpush1.bf16.msra.mxu0 %v2073
        %2108 = vmatprep.subr.bf16.mxu0 0
        %2109 = vmatpush1.bf16.msra.mxu0 %v2074
        %2110 = vmatprep.subr.bf16.mxu0 0
        %2111 = vmatpush1.bf16.msra.mxu0 %v2075
        %2112 = vmatprep.subr.bf16.mxu0 0
        %2113 = vmatpush1.bf16.msra.mxu0 0
        %2114 = vmatprep.subr.bf16.mxu0 0
        %2115 = vmatpush1.bf16.msra.mxu0 0
        %2116 = vmatprep.subr.bf16.mxu0 0
        %2117 = vmatpush1.bf16.msra.mxu0 0
        %2118 = vmatprep.subr.bf16.mxu0 0
        %2119 = vmatpush1.bf16.msra.mxu0 0
        %2120 = vmatprep.subr.bf16.mxu0 0
        %2121 = vmatpush1.bf16.msra.mxu0 0
        %2122 = vmatprep.subr.bf16.mxu0 0
        %2123 = vmatpush1.bf16.msra.mxu0 0
        %2124 = vmatprep.subr.bf16.mxu0 0
        %2125 = vmatpush1.bf16.msra.mxu0 0
        %2126 = vmatprep.mubr.bf16.mxu0 %v2086
        %2127 = vmatmul.mubr.bf16.gmra.mrb[0].mxu0 %v2022
        %v2128 = vpop.f32.mrb[0].mxu0
        %v2129 = vadd.f32 %v2020, %v2128
        %v2130 = vpop.f32.mrb[0].mxu0
        %v2131 = vpop.f32.mrb[0].mxu0
        %v2132 = vadd.f32 %v2020, %v2131
        %v2133 = vpop.f32.mrb[0].mxu0
        %2134 = vmatprep.mubr.bf16.mxu0 %v2089
        %2135 = vmatmul.mubr.bf16.gmra.mrb[0].mxu0 %v2024
        %v2136 = vpop.f32.mrb[0].mxu0
        %v2137 = vadd.f32 %v2020, %v2136
        %v2138 = vpop.f32.mrb[0].mxu0
        %v2139 = vpop.f32.mrb[0].mxu0
        %v2140 = vadd.f32 %v2020, %v2139
        %v2141 = vpop.f32.mrb[0].mxu0
        %2142 = vmatprep.mubr.bf16.mxu0 %v2092
        %2143 = vmatmul.mubr.bf16.gmra.mrb[0].mxu0 %v2026
        %v2144 = vpop.f32.mrb[0].mxu0
        %v2145 = vadd.f32 %v2020, %v2144
        %v2146 = vpop.f32.mrb[0].mxu0
        %v2147 = vpop.f32.mrb[0].mxu0
        %v2148 = vadd.f32 %v2020, %v2147
        %v2149 = vpop.f32.mrb[0].mxu0
        %2150 = vdwg.mxu0
        %v2151 = vmax.f32 %v2129, 0.0
        %v2152 = vmax.f32 %v2132, 0.0
        %v2153 = vmax.f32 %v2137, 0.0
        %v2154 = vmax.f32 %v2140, 0.0
        %v2155 = vmax.f32 %v2145, 0.0
        %v2156 = vmax.f32 %v2148, 0.0
        %v2157 = vpack.c.bf16 %v2152, %v2151
        %v2158 = vpack.c.bf16 %v2154, %v2153
        %v2159 = vpack.c.bf16 %v2156, %v2155
        %v2163 = vunpack.c.l.b16 %v2157
        %v2164 = vunpack.c.h.b16 %v2157
        %v2165 = vunpack.c.l.b16 %v2158
        %v2166 = vunpack.c.h.b16 %v2158
        %v2167 = vunpack.c.l.b16 %v2159
        %v2168 = vunpack.c.h.b16 %v2159
        %v2169 = vpack.c.b16 %v2163, %v2163
        %v2170 = vpack.c.b16 %v2166, %v2166
        %v2171 = vpack.c.b16 %v2165, %v2165
        %v2172 = vpack.c.b16 %v2168, %v2168
        %v2174 = vshrl.u32 %v2171, 16
        %v2176 = vshll.u32 %v2171, 16
        %v2178 = vrot.slane %v2176, 1
        %v2179 = vor.u32 %v2174, %v2178
        %v2181 = vshrl.u32 %v2172, 16
        %v2183 = vshll.u32 %v2172, 16
        %v2185 = vrot.slane %v2183, 1
        %v2186 = vor.u32 %v2181, %v2185
        %v2189 = vsel %vm1568, 0, %v2179
        %v2190 = vsel %vm1568, 0, %v2186
        %v2191 = vmul.bf16 %v2189, %v1528
        %v2192 = vmul.bf16 %v2190, %v1528
        %v2194 = vshrl.u32 %v2191, 16
        %v2196 = vrot.slane %v2194, 6
        %v2197 = vshll.u32 %v2191, 16
        %v2199 = vrot.slane %v2197, 7
        %v2200 = vor.u32 %v2196, %v2199
        %v2202 = vshrl.u32 %v2192, 16
        %v2204 = vrot.slane %v2202, 6
        %v2205 = vshll.u32 %v2192, 16
        %v2207 = vrot.slane %v2205, 7
        %v2208 = vor.u32 %v2204, %v2207
        %v2211 = vsel %vm1631, 0, %v2200
        %v2212 = vsel %vm1631, 0, %v2208
        %v2213 = vpack.c.b16 %v2164, %v2164
        %v2214 = vpack.c.b16 %v2167, %v2167
        %v2216 = vshrl.u32 %v2213, 16
        %v2218 = vshll.u32 %v2213, 16
        %v2220 = vrot.slane %v2218, 1
        %v2221 = vor.u32 %v2216, %v2220
        %v2223 = vshrl.u32 %v2214, 16
        %v2225 = vshll.u32 %v2214, 16
        %v2227 = vrot.slane %v2225, 1
        %v2228 = vor.u32 %v2223, %v2227
        %v2231 = vsel %vm1631, 0, %v2221
        %v2232 = vsel %vm1631, 0, %v2228
        %v2233 = vrot.slane %v2174, 7
        %v2234 = vor.u32 %v2233, %v2176
        %v2235 = vrot.slane %v2181, 7
        %v2236 = vor.u32 %v2235, %v2183
        %v2239 = vsel %vm1631, 0, %v2234
        %v2240 = vsel %vm1631, 0, %v2236
        %v2241 = vpack.c.b16 %v2164, %v2163
        %v2242 = vpack.c.b16 %v2167, %v2166
        %v2244 = vshrl.u32 %v2241, 16
        %v2246 = vrot.slane %v2244, 2
        %v2247 = vshll.u32 %v2241, 16
        %v2249 = vrot.slane %v2247, 3
        %v2250 = vor.u32 %v2246, %v2249
        %v2252 = vshrl.u32 %v2242, 16
        %v2254 = vrot.slane %v2252, 2
        %v2255 = vshll.u32 %v2242, 16
        %v2257 = vrot.slane %v2255, 3
        %v2258 = vor.u32 %v2254, %v2257
        %v2261 = vsel %vm1568, 0, %v2250
        %v2262 = vsel %vm1568, 0, %v2258
        %v2263 = vmul.bf16 %v2261, %v1528
        %v2264 = vmul.bf16 %v2262, %v1528
        %2267 = vrot.lane.b32.xlu0 %v2231, 32
        %v2268 = vpop.permute.xlu0 %2267
        %2269 = vrot.lane.b32.xlu0 %v2232, 32
        %v2270 = vpop.permute.xlu0 %2269
        %2273 = vrot.lane.b32.xlu0 %v2239, 64
        %v2274 = vpop.permute.xlu0 %2273
        %2275 = vrot.lane.b32.xlu0 %v2240, 64
        %v2276 = vpop.permute.xlu0 %2275
        %2279 = vrot.lane.b32.xlu0 %v2263, 96
        %v2280 = vpop.permute.xlu0 %2279
        %2281 = vrot.lane.b32.xlu0 %v2264, 96
        %v2282 = vpop.permute.xlu0 %2281
        %v2283 = vrot.slane %v2241, 3
        %v2284 = vrot.slane %v2242, 3
        %2285 = vrot.lane.b32.xlu0 %v2283, 32
        %v2286 = vpop.permute.xlu0 %2285
        %2287 = vrot.lane.b32.xlu0 %v2284, 32
        %v2288 = vpop.permute.xlu0 %2287
        %2291 = vrot.lane.b32.xlu0 %v2191, 64
        %v2292 = vpop.permute.xlu0 %2291
        %2293 = vrot.lane.b32.xlu0 %v2192, 64
        %v2294 = vpop.permute.xlu0 %2293
        %v2295 = vpack.c.b16 %v2165, %v2164
        %v2296 = vpack.c.b16 %v2168, %v2167
        %v2297 = vrot.slane %v2295, 2
        %v2298 = vrot.slane %v2296, 2
        %2299 = vrot.lane.b32.xlu0 %v2297, 96
        %v2300 = vpop.permute.xlu0 %2299
        %2301 = vrot.lane.b32.xlu0 %v2298, 96
        %v2302 = vpop.permute.xlu0 %2301
        %v2303 = vrot.slane %v2171, 1
        %v2304 = vrot.slane %v2172, 1
        %v2307 = vsel %vm1928, %v2211, %v2268
        %v2310 = vsel %vm1928, %v2212, %v2270
        %v2312 = vsel %vm1946, %v2307, %v2274
        %v2314 = vsel %vm1946, %v2310, %v2276
        %v2316 = vsel %vm1963, %v2312, %v2280
        %v2318 = vsel %vm1963, %v2314, %v2282
        %v2321 = vsel %vm1928, %v2169, %v2286
        %v2324 = vsel %vm1928, %v2170, %v2288
        %v2326 = vsel %vm1946, %v2321, %v2292
        %v2328 = vsel %vm1946, %v2324, %v2294
        %v2330 = vsel %vm1963, %v2326, %v2300
        %v2332 = vsel %vm1963, %v2328, %v2302
        %v2334 = vsel %vm1597, %v2316, 0
        %v2335 = vsel %vm1597, %v2330, 0
        %v2337 = vsel %vm1597, %v2303, 0
        %v2338 = vsel %vm1597, %v2318, 0
        %v2339 = vsel %vm1597, %v2332, 0
        %v2341 = vsel %vm1597, %v2304, 0
        %v2348 = vunpack.c.l.b16 %v2334
        %v2349 = vunpack.c.l.b16 %v2335
        %v2350 = vunpack.c.l.b16 %v2337
        %v2351 = vunpack.c.l.b16 %v2338
        %v2352 = vunpack.c.l.b16 %v2339
        %v2353 = vunpack.c.l.b16 %v2341
        %v2354 = vld [vmem:[#allocation11] sm:$0xf]
        %v2355 = vld [vmem:[#allocation11 + $0x4] sm:$0xf]
        %v2356 = vld [vmem:[#allocation11 + $0x8] sm:$0xf]
        %v2357 = vld [vmem:[#allocation11 + $0xc] sm:$0xf]
        %v2358 = vld [vmem:[#allocation11 + $0x10] sm:$0xf]
        %v2359 = vld [vmem:[#allocation11 + $0x14] sm:$0xf]
        %v2360 = vld [vmem:[#allocation11 + $0x18] sm:$0xf]
        %v2361 = vld [vmem:[#allocation11 + $0x1c] sm:$0xf]
        %v2362 = vld [vmem:[#allocation11 + $0x20] sm:$0xf]
        %v2363 = vld [vmem:[#allocation11 + $0x24] sm:$0xf]
        %v2364 = vld [vmem:[#allocation11 + $0x28] sm:$0xf]
        %v2365 = vld [vmem:[#allocation11 + $0x2c] sm:$0xf]
        %v2366 = vld [vmem:[#allocation11 + $0x30] sm:$0xf]
        %v2367 = vld [vmem:[#allocation11 + $0x34] sm:$0xf]
        %v2368 = vld [vmem:[#allocation11 + $0x38] sm:$0xf]
        %v2369 = vld [vmem:[#allocation11 + $0x3c] sm:$0xf]
        %v2370 = vld [vmem:[#allocation11 + $0x40] sm:$0xf]
        %v2371 = vld [vmem:[#allocation11 + $0x44] sm:$0xf]
        %v2372 = vld [vmem:[#allocation11 + $0x48] sm:$0xf]
        %v2373 = vld [vmem:[#allocation11 + $0x4c] sm:$0xf]
        %v2374 = vld [vmem:[#allocation11 + $0x50] sm:$0xf]
        %v2375 = vld [vmem:[#allocation11 + $0x54] sm:$0xf]
        %v2376 = vld [vmem:[#allocation11 + $0x58] sm:$0xf]
        %v2377 = vld [vmem:[#allocation11 + $0x5c] sm:$0xf]
        %v2378 = vld [vmem:[#allocation11 + $0x60] sm:$0xf]
        %v2379 = vld [vmem:[#allocation11 + $0x64] sm:$0xf]
        %v2380 = vld [vmem:[#allocation11 + $0x68] sm:$0xf]
        %v2381 = vld [vmem:[#allocation11 + $0x6c] sm:$0xf]
        %v2382 = vld [vmem:[#allocation11 + $0x70] sm:$0xf]
        %v2383 = vld [vmem:[#allocation11 + $0x74] sm:$0xf]
        %v2384 = vld [vmem:[#allocation11 + $0x78] sm:$0xf]
        %v2385 = vld [vmem:[#allocation11 + $0x7c] sm:$0xf]
        %v2386 = vld [vmem:[#allocation11 + $0x80] sm:$0xf]
        %v2387 = vld [vmem:[#allocation11 + $0x84] sm:$0xf]
        %v2388 = vld [vmem:[#allocation11 + $0x88] sm:$0xf]
        %v2389 = vld [vmem:[#allocation11 + $0x8c] sm:$0xf]
        %v2390 = vld [vmem:[#allocation13] sm:$0x1]
        %v2392 = vlaneseq
        %v2393 = vshrl.u32 %v2392, 7
        %v2394 = vsub.s32 0, %v2393
        %v2395 = vrot.slane %v2390, %v2394
        %v2397 = vpack.c.b16 %v2351, %v2348
        %v2398 = vpack.c.b16 %v2352, %v2349
        %v2399 = vpack.c.b16 %v2353, %v2350
        %v2438 = vunpack.c.l.b16 %v2354
        %v2439 = vunpack.c.l.b16 %v2355
        %v2440 = vunpack.c.l.b16 %v2356
        %v2441 = vunpack.c.l.b16 %v2357
        %v2442 = vunpack.c.l.b16 %v2358
        %v2443 = vunpack.c.l.b16 %v2359
        %v2444 = vunpack.c.l.b16 %v2360
        %v2445 = vunpack.c.l.b16 %v2361
        %v2446 = vunpack.c.l.b16 %v2362
        %v2447 = vunpack.c.l.b16 %v2363
        %v2448 = vunpack.c.l.b16 %v2364
        %v2449 = vunpack.c.l.b16 %v2365
        %v2450 = vunpack.c.l.b16 %v2366
        %v2451 = vunpack.c.l.b16 %v2367
        %v2452 = vunpack.c.l.b16 %v2368
        %v2453 = vunpack.c.l.b16 %v2369
        %v2454 = vunpack.c.l.b16 %v2370
        %v2455 = vunpack.c.l.b16 %v2371
        %v2456 = vunpack.c.l.b16 %v2372
        %v2457 = vunpack.c.l.b16 %v2373
        %v2458 = vunpack.c.l.b16 %v2374
        %v2459 = vunpack.c.l.b16 %v2375
        %v2460 = vunpack.c.l.b16 %v2376
        %v2461 = vunpack.c.l.b16 %v2377
        %v2462 = vunpack.c.l.b16 %v2378
        %v2463 = vunpack.c.l.b16 %v2379
        %v2464 = vunpack.c.l.b16 %v2380
        %v2465 = vunpack.c.l.b16 %v2381
        %v2466 = vunpack.c.l.b16 %v2382
        %v2467 = vunpack.c.l.b16 %v2383
        %v2468 = vunpack.c.l.b16 %v2384
        %v2469 = vunpack.c.l.b16 %v2385
        %v2470 = vunpack.c.l.b16 %v2386
        %v2471 = vunpack.c.l.b16 %v2387
        %v2472 = vunpack.c.l.b16 %v2388
        %v2473 = vunpack.c.l.b16 %v2389
        %v2474 = vpack.c.b16 %v2439, %v2438
        %v2475 = vpack.c.b16 %v2441, %v2440
        %v2476 = vpack.c.b16 %v2443, %v2442
        %v2477 = vpack.c.b16 %v2445, %v2444
        %v2478 = vpack.c.b16 %v2447, %v2446
        %v2479 = vpack.c.b16 %v2449, %v2448
        %v2480 = vpack.c.b16 %v2451, %v2450
        %v2481 = vpack.c.b16 %v2453, %v2452
        %v2482 = vpack.c.b16 %v2455, %v2454
        %v2483 = vpack.c.b16 %v2457, %v2456
        %v2484 = vpack.c.b16 %v2459, %v2458
        %v2485 = vpack.c.b16 %v2461, %v2460
        %v2486 = vpack.c.b16 %v2463, %v2462
        %v2487 = vpack.c.b16 %v2465, %v2464
        %v2488 = vpack.c.b16 %v2467, %v2466
        %v2489 = vpack.c.b16 %v2469, %v2468
        %v2490 = vpack.c.b16 %v2471, %v2470
        %v2491 = vpack.c.b16 %v2473, %v2472
        %v2511 = vsel %vm1928, %v2399, 0
        %2513 = vmatprep.subr.bf16.mxu0 0
        %2514 = vmatpush1.bf16.msra.mxu0 %v2474
        %2515 = vmatprep.subr.bf16.mxu0 0
        %2516 = vmatpush1.bf16.msra.mxu0 %v2475
        %2517 = vmatprep.subr.bf16.mxu0 0
        %2518 = vmatpush1.bf16.msra.mxu0 %v2476
        %2519 = vmatprep.subr.bf16.mxu0 0
        %2520 = vmatpush1.bf16.msra.mxu0 %v2477
        %2521 = vmatprep.subr.bf16.mxu0 0
        %2522 = vmatpush1.bf16.msra.mxu0 %v2478
        %2523 = vmatprep.subr.bf16.mxu0 0
        %2524 = vmatpush1.bf16.msra.mxu0 %v2479
        %2525 = vmatprep.subr.bf16.mxu0 0
        %2526 = vmatpush1.bf16.msra.mxu0 %v2480
        %2527 = vmatprep.subr.bf16.mxu0 0
        %2528 = vmatpush1.bf16.msra.mxu0 %v2481
        %2529 = vmatprep.subr.bf16.mxu0 0
        %2530 = vmatpush1.bf16.msra.mxu0 %v2482
        %2531 = vmatprep.subr.bf16.mxu0 0
        %2532 = vmatpush1.bf16.msra.mxu0 %v2483
        %2533 = vmatprep.subr.bf16.mxu0 0
        %2534 = vmatpush1.bf16.msra.mxu0 %v2484
        %2535 = vmatprep.subr.bf16.mxu0 0
        %2536 = vmatpush1.bf16.msra.mxu0 %v2485
        %2537 = vmatprep.subr.bf16.mxu0 0
        %2538 = vmatpush1.bf16.msra.mxu0 %v2486
        %2539 = vmatprep.subr.bf16.mxu0 0
        %2540 = vmatpush1.bf16.msra.mxu0 %v2487
        %2541 = vmatprep.subr.bf16.mxu0 0
        %2542 = vmatpush1.bf16.msra.mxu0 %v2488
        %2543 = vmatprep.subr.bf16.mxu0 0
        %2544 = vmatpush1.bf16.msra.mxu0 %v2489
        %2545 = vmatprep.mubr.bf16.mxu0 %v2398
        %2546 = vmatmul.mubr.bf16.gmra.mrb[0].mxu0 %v2397
        %v2547 = vpop.f32.mrb[0].mxu0
        %v2548 = vadd.f32 %v2395, %v2547
        %v2549 = vpop.f32.mrb[0].mxu0
        %v2550 = vpop.f32.mrb[0].mxu0
        %v2551 = vadd.f32 %v2395, %v2550
        %v2552 = vpop.f32.mrb[0].mxu0
        %2553 = vdwg.mxu0
        %2554 = vmatprep.subr.bf16.mxu0 0
        %2555 = vmatpush1.bf16.msra.mxu0 %v2490
        %2556 = vmatprep.subr.bf16.mxu0 0
        %2557 = vmatpush1.bf16.msra.mxu0 %v2491
        %2558 = vmatprep.subr.bf16.mxu0 0
        %2559 = vmatpush1.bf16.msra.mxu0 0
        %2560 = vmatprep.subr.bf16.mxu0 0
        %2561 = vmatpush1.bf16.msra.mxu0 0
        %2562 = vmatprep.subr.bf16.mxu0 0
        %2563 = vmatpush1.bf16.msra.mxu0 0
        %2564 = vmatprep.subr.bf16.mxu0 0
        %2565 = vmatpush1.bf16.msra.mxu0 0
        %2566 = vmatprep.subr.bf16.mxu0 0
        %2567 = vmatpush1.bf16.msra.mxu0 0
        %2568 = vmatprep.subr.bf16.mxu0 0
        %2569 = vmatpush1.bf16.msra.mxu0 0
        %2570 = vmatprep.subr.bf16.mxu0 0
        %2571 = vmatpush1.bf16.msra.mxu0 0
        %2572 = vmatprep.subr.bf16.mxu0 0
        %2573 = vmatpush1.bf16.msra.mxu0 0
        %2574 = vmatprep.subr.bf16.mxu0 0
        %2575 = vmatpush1.bf16.msra.mxu0 0
        %2576 = vmatprep.subr.bf16.mxu0 0
        %2577 = vmatpush1.bf16.msra.mxu0 0
        %2578 = vmatprep.subr.bf16.mxu0 0
        %2579 = vmatpush1.bf16.msra.mxu0 0
        %2580 = vmatprep.subr.bf16.mxu0 0
        %2581 = vmatpush1.bf16.msra.mxu0 0
        %2582 = vmatprep.subr.bf16.mxu0 0
        %2583 = vmatpush1.bf16.msra.mxu0 0
        %2584 = vmatprep.subr.bf16.mxu0 0
        %2585 = vmatpush1.bf16.msra.mxu0 0
        %2586 = vmatprep.mubr.bf16.mxu0 0
        %2587 = vmatmul.mubr.bf16.gmra.mrb[0].mxu0 %v2511
        %v2588 = vpop.f32.mrb[0].mxu0
        %v2589 = vadd.f32 %v2548, %v2588
        %v2590 = vpop.f32.mrb[0].mxu0
        %v2591 = vpop.f32.mrb[0].mxu0
        %v2592 = vadd.f32 %v2551, %v2591
        %v2593 = vpop.f32.mrb[0].mxu0
        %2594 = vdwg.mxu0
        %v2595 = vmax.f32 %v2589, 0.0
        %v2596 = vmax.f32 %v2592, 0.0
        %vm2597 = vcmask 521216
        %2598 = vst.msk [vmem:[%s378] sm:$0x3f] %vm2597, %v2595
        %2599 = vst.msk [vmem:[%s378 + $0x8] sm:$0x3f] %vm2597, %v2596
        %s2600 = sand.u32 %s187, 1
        %s2601 = scalar_lea.sflag [#allocation4], %s2600
        %s2602 = sand.u32 %s187, 1
        %s2603 = smul.addr %s2602, 16
        %s2604 = scalar_lea.vmem [#allocation14], %s2603
        // Predicated region
        $region77: #{encoder_forward.1} parent=47 // pred_check
          %p2605 = pneg %p197
        $region78: #{encoder_forward.1} parent=47 // pred_check_branch
          %2607 = sbr.rel (%p2605) target = $region80
        $region79: #{encoder_forward.1} parent=47 // pred_region
          %s2608 = smul.u32 2, %s27
          %s2610 = ssub.s32 256, 256
          %2611 = vsyncadd %s2601, %s2610
          %s2612 = smul.addr %s2608, 128
          %s2613 = scalar_lea.hbm %s7, %s2612
          %s2614 = sshll.u32 %s2604, 4
          %s2615 = int_to_ptr.vmem [resolvable:$true] %s2614
          %2620 = dma.vmem_to_hbm [thread:$0]  %s2615, 256, %s2613, %s2601, 128, 128, 8
        $region80: #{encoder_forward.1} parent=47 // pred_fallthru
          _
      $region48: #{encoder_forward.1} parent=5 // pred_fallthru
        _
      %p2621 = scmp.le.s32.totalorder 2, %s22
      // Predicated region
      $region81: #{encoder_forward.1} parent=5 // pred_check
        %p2622 = pneg %p2621
      $region82: #{encoder_forward.1} parent=5 // pred_check_branch
        %2624 = sbr.rel (%p2622) target = $region84
      $region83: #{encoder_forward.1} parent=5 // pred_region
        %s2625 = ssub.s32 %s22, 2
        // Predicated region
        $region85: #{encoder_forward.1} parent=83 // pred_check
          %p2626 = pneg %p203
        $region86: #{encoder_forward.1} parent=83 // pred_check_branch
          %2628 = sbr.rel (%p2626) target = $region88
        $region87: #{encoder_forward.1} parent=83 // pred_region
          %s2629 = sand.u32 %s188, 1
          %s2630 = scalar_lea.sflag [#allocation4], %s2629
          %s2631 = sand.u32 %s188, 1
          %s2632 = smul.addr %s2631, 16
          %s2633 = scalar_lea.vmem [#allocation14], %s2632
          %2634 = dma.done %s2630, 256
        $region88: #{encoder_forward.1} parent=83 // pred_fallthru
          _
      $region84: #{encoder_forward.1} parent=5 // pred_fallthru
        _
    $region6: #{encoder_forward.1} parent=1 // loop_footer
      %s26 = sadd.s32 1, %s22
    $region7: #{encoder_forward.1} parent=1 // loop_footer_branch
      %21 = sbr.rel target = $region3
    $region8: #{encoder_forward.1} parent=1 // loop_exit
      _
    %2635 = vsyncpa [#allocation3], 1
    %s2636 = scalar_lea.sflag [#allocation3], 1
    %2637 = vsyncpa %s2636, 1
    %2638 = vsyncpa [#allocation6], 1
    %2639 = vsyncpa [#allocation9], 1
    %2640 = vsyncpa [#allocation12], 1
    %2641 = vsyncpa [#allocation4], 1
    %s2642 = scalar_lea.sflag [#allocation4], 1
    %2643 = vsyncpa %s2642, 1

</llo_original>
